<compile_context>
chip_gen: v5e
topology: v5e:2x2
jax: 0.10.0
libtpu: 0.0.40
codegen_flags: <defaults>
</compile_context>

<pallas_src>
import functools

import jax
import jax.numpy as jnp
from jax import lax
from jax.experimental import pallas as pl
from jax.experimental.pallas import tpu as pltpu


def _round_up(x, m):
    return ((x + m - 1) // m) * m


def _conv3x3_bn_relu_kernel(x_ref, w_ref, shift_ref, o_ref, *, th, w_out, wp):
    """One (batch, H-tile, out-channel-tile) grid step.

    x_ref:     ((th+2)*wp, C_in)  flattened, spatially padded activations
               (row r <-> padded-row r // wp, padded-col r % wp), MXU dtype.
    w_ref:     (9, C_in, tn)      BN-scale-folded weights, tap-major (kh*3+kw).
    shift_ref: (1, tn)            folded conv-bias + BN shift (f32).
    o_ref:     (th, w_out, tn)    output tile.
    """
    tn = o_ref.shape[-1]
    rows = th * wp

    # Per-kw partial sums over the padded row space, accumulated over kh.
    # The kh tap shift is an aligned leading-dim view of the x block
    # (wp % 16 == 0), so the MXU reads its LHS straight from VMEM:
    # no tap copies, no reshapes, no casts.
    p = [None, None, None]
    for kh in range(3):
        base = x_ref[pl.ds(kh * wp, rows), :]            # (rows, C_in) view
        for kw in range(3):
            d = jnp.dot(base, w_ref[3 * kh + kw],
                        preferred_element_type=jnp.float32)
            p[kw] = d if p[kw] is None else p[kw] + d

    # kw tap shift applied to the f32 partial sums as static column slices of
    # the padded row space (also drops the W-padding seam columns).  This
    # replaces v2's nine activation-sized strided-slice copies; a pltpu.roll
    # on the XLU would also work, slices were chosen for layout-safe lowering.
    p = [q.reshape(th, wp, tn) for q in p]
    acc = (p[0][:, 0:w_out, :]
           + p[1][:, 1:w_out + 1, :]
           + p[2][:, 2:w_out + 2, :])                    # (th, w_out, tn)

    y = jnp.maximum(acc + shift_ref[...], 0.0)           # fused BN shift + ReLU
    o_ref[...] = y.astype(o_ref.dtype)


def conv_block_pallas(x_nhwc, weight, bias, gamma, beta, running_mean,
                      running_var, eps=1e-5, *, tn=None, th=None,
                      mxu_dtype=jnp.bfloat16, out_dtype=None,
                      vmem_budget_bytes=40 << 20):
    """Fused Conv2d(3x3, pad=1, stride=1) + BatchNorm2d(eval) + ReLU, NHWC.

    x_nhwc: (N, H, W, C_in); weight: (C_out, C_in, 3, 3) PyTorch OIHW layout.
    Returns (N, H, W, C_out) in out_dtype (bf16 unless mxu_dtype is float32).
    """
    N, H, W, C_in = x_nhwc.shape
    C_out = weight.shape[0]
    assert weight.shape == (C_out, C_in, 3, 3)

    mxu_dtype = jnp.dtype(mxu_dtype)
    if out_dtype is None:
        out_dtype = (jnp.float32 if mxu_dtype == jnp.dtype(jnp.float32)
                     else jnp.bfloat16)
    out_dtype = jnp.dtype(out_dtype)

    # ---- fold conv bias + BatchNorm(eval) into weight scale / epilogue shift
    scale = gamma / jnp.sqrt(running_var + eps)                  # (C_out,)
    shift = beta + (bias - running_mean) * scale                 # (C_out,)
    # NOTE: BN scale folded before the bf16 weight cast; keep the scale in the
    # f32 epilogue instead if per-channel scales ever get extreme.
    w = jnp.transpose(weight, (2, 3, 1, 0)) * scale              # (3,3,C_in,C_out)
    w = w.reshape(9, C_in, C_out)

    # ---- lane-dense output-channel tiles ------------------------------------
    Cp = _round_up(C_out, 128)
    if tn is None or tn % 128 != 0 or Cp % tn != 0:
        tn = 256 if Cp % 256 == 0 else 128           # 256 fills the v6e/v7x MXU
    tn = min(tn, Cp)
    if Cp != C_out:
        w = jnp.pad(w, ((0, 0), (0, 0), (0, Cp - C_out)))
        shift = jnp.pad(shift, (0, Cp - C_out))
    w = w.astype(mxu_dtype)
    shift2 = shift.reshape(1, Cp).astype(jnp.float32)

    # ---- pad + cast activations in ONE fused XLA pass ------------------------
    # Width padded to a multiple of 16 so every kh view and row-space reshape
    # stays on (8,128)/(16,128) tile boundaries (free views, no relayouts).
    Wp = _round_up(W + 2, 16)
    x_pad = jnp.pad(x_nhwc.astype(mxu_dtype),
                    ((0, 0), (1, 1), (1, Wp - W - 1), (0, 0)))   # (N, H+2, Wp, C)

    # ---- H tiling (1-row halo) so blocks + f32 accumulators fit VMEM --------
    def _vmem_estimate(th_):
        rows_ = th_ * Wp
        cin_lanes = _round_up(C_in, 128)                  # lane padding of x
        x_blk = (th_ + 2) * Wp * cin_lanes * mxu_dtype.itemsize
        w_blk = 9 * _round_up(C_in, 16) * tn * mxu_dtype.itemsize
        o_blk = th_ * _round_up(W, 8) * tn * out_dtype.itemsize
        s_blk = tn * 4
        temps = 6 * rows_ * tn * 4            # 3 f32 partial sums + slice temps
        return 2 * (x_blk + w_blk + o_blk + s_blk) + temps

    if th is None:
        divisors = [d for d in range(H, 0, -1) if H % d == 0]
        th = next((d for d in divisors if _vmem_estimate(d) <= vmem_budget_bytes),
                  divisors[-1])
    elif H % th != 0:
        raise ValueError(f"th={th} must divide H={H}")
    nH = H // th

    if nH == 1:
        x_tiles = x_pad[:, None]                          # (N, 1, H+2, Wp, C)
    else:
        win = (jnp.arange(nH) * th)[:, None] + jnp.arange(th + 2)[None, :]
        x_tiles = x_pad[:, win]                           # (N, nH, th+2, Wp, C)
    x_flat = x_tiles.reshape(N, nH, (th + 2) * Wp, C_in)  # metadata-only reshape

    grid = (N, nH, Cp // tn)
    kernel = functools.partial(_conv3x3_bn_relu_kernel, th=th, w_out=W, wp=Wp)

    vmem_limit = int(min(60 << 20, max(32 << 20, _vmem_estimate(th) * 3 // 2)))
    flops = 2 * N * H * W * 9 * C_in * Cp
    bytes_accessed = int(x_flat.size * mxu_dtype.itemsize
                         + w.size * mxu_dtype.itemsize
                         + shift2.size * 4
                         + N * H * W * Cp * out_dtype.itemsize)

    out = pl.pallas_call(
        kernel,
        out_shape=jax.ShapeDtypeStruct((N, nH, th, W, Cp), out_dtype),
        grid_spec=pltpu.PrefetchScalarGridSpec(
            num_scalar_prefetch=0,
            grid=grid,
            in_specs=[
                # x block index is constant along j -> fetched once per (n, hi).
                pl.BlockSpec((None, None, (th + 2) * Wp, C_in),
                             lambda n, hi, j: (n, hi, 0, 0)),
                pl.BlockSpec((9, C_in, tn), lambda n, hi, j: (0, 0, j)),
                pl.BlockSpec((1, tn), lambda n, hi, j: (0, j)),
            ],
            out_specs=pl.BlockSpec((None, None, th, W, tn),
                                   lambda n, hi, j: (n, hi, 0, 0, j)),
        ),
        compiler_params=pltpu.CompilerParams(
            # Channel-tile axis kept "arbitrary" so megacore / v7x 2-TC sharding
            # lands on batch / H tiles and never re-DMAs the same x block.
            dimension_semantics=("parallel", "parallel", "arbitrary"),
            vmem_limit_bytes=vmem_limit),
        cost_estimate=pl.CostEstimate(flops=flops, transcendentals=0,
                                      bytes_accessed=bytes_accessed),
    )(x_flat, w, shift2)

    out = out.reshape(N, H, W, Cp)
    if Cp != C_out:
        out = out[..., :C_out]
    return out


def conv_block_pallas_nchw(x_nchw, *args, **kwargs):
    """PyTorch-layout adapter (NCHW in / NCHW out); costs two layout passes.
    Prefer the NHWC entry point and keep activations NHWC across layers."""
    y = conv_block_pallas(jnp.transpose(x_nchw, (0, 2, 3, 1)), *args, **kwargs)
    return jnp.transpose(y, (0, 3, 1, 2))


def conv_block_reference_nhwc(x_nhwc, weight, bias, gamma, beta,
                              running_mean, running_var, eps=1e-5):
    """Pure-JAX reference: Conv2d(3x3, pad=1) -> BatchNorm2d(eval) -> ReLU."""
    w_hwio = jnp.transpose(weight, (2, 3, 1, 0))
    y = lax.conv_general_dilated(
        x_nhwc, w_hwio, window_strides=(1, 1), padding="SAME",
        dimension_numbers=("NHWC", "HWIO", "NHWC"))
    y = y + bias[None, None, None, :]
    scale = gamma / jnp.sqrt(running_var + eps)
    y = (y - running_mean) * scale + beta
    return jnp.maximum(y, 0.0)


if __name__ == "__main__":
    key = jax.random.PRNGKey(0)
    ks = jax.random.split(key, 7)

    # PyTorch-style input: (N, C_in, H, W) = (2, 4, 16, 16), C_out = 8.
    N, C_in, C_out, H, W = 2, 4, 8, 16, 16
    x_nchw = jax.random.normal(ks[0], (N, C_in, H, W), dtype=jnp.float32)
    x_nhwc = jnp.transpose(x_nchw, (0, 2, 3, 1))

    weight = 0.1 * jax.random.normal(ks[1], (C_out, C_in, 3, 3), dtype=jnp.float32)
    bias = 0.1 * jax.random.normal(ks[2], (C_out,), dtype=jnp.float32)
    gamma = 1.0 + 0.1 * jax.random.normal(ks[3], (C_out,), dtype=jnp.float32)
    beta = 0.1 * jax.random.normal(ks[4], (C_out,), dtype=jnp.float32)
    running_mean = 0.1 * jax.random.normal(ks[5], (C_out,), dtype=jnp.float32)
    running_var = jnp.abs(1.0 + 0.1 * jax.random.normal(ks[6], (C_out,),
                                                        dtype=jnp.float32))

    ref = conv_block_reference_nhwc(x_nhwc, weight, bias, gamma, beta,
                                    running_mean, running_var)

    # 1) f32 MXU operands, whole-image blocks, tight tolerance.
    out_f32 = conv_block_pallas(x_nhwc, weight, bias, gamma, beta,
                                running_mean, running_var,
                                mxu_dtype=jnp.float32, out_dtype=jnp.float32)
    out_f32 = jax.block_until_ready(out_f32)
    assert out_f32.shape == (N, H, W, C_out)
    assert jnp.allclose(out_f32, ref, atol=1e-4, rtol=1e-4), \
        f"f32 max err {jnp.max(jnp.abs(out_f32 - ref))}"

    # 2) default path: bf16 activations/weights in HBM+VMEM, bf16 output.
    out_bf16 = conv_block_pallas(x_nhwc, weight, bias, gamma, beta,
                                 running_mean, running_var)
    out_bf16 = jax.block_until_ready(out_bf16)
    assert out_bf16.dtype == jnp.bfloat16 and out_bf16.shape == (N, H, W, C_out)
    assert jnp.allclose(out_bf16.astype(jnp.float32), ref, atol=3e-2, rtol=3e-2), \
        f"bf16 max err {jnp.max(jnp.abs(out_bf16.astype(jnp.float32) - ref))}"

    # 3) forced H-tiling with 1-row halo windows (th=8 -> 2 H tiles).
    out_tiled = conv_block_pallas(x_nhwc, weight, bias, gamma, beta,
                                  running_mean, running_var, th=8,
                                  mxu_dtype=jnp.float32, out_dtype=jnp.float32)
    out_tiled = jax.block_until_ready(out_tiled)
    assert jnp.allclose(out_tiled, ref, atol=1e-4, rtol=1e-4), \
        f"tiled max err {jnp.max(jnp.abs(out_tiled - ref))}"

    # 4) W not a multiple of 8 and C_out > 128: exercises tn=256 lane tiles,
    #    channel padding/slice, and seam handling for odd widths.
    N2, Cin2, Cout2, H2, W2 = 2, 6, 192, 12, 12
    kk = jax.random.split(jax.random.PRNGKey(1), 7)
    x2 = jax.random.normal(kk[0], (N2, H2, W2, Cin2), dtype=jnp.float32)
    wt2 = 0.1 * jax.random.normal(kk[1], (Cout2, Cin2, 3, 3), dtype=jnp.float32)
    b2 = 0.1 * jax.random.normal(kk[2], (Cout2,), dtype=jnp.float32)
    g2 = 1.0 + 0.1 * jax.random.normal(kk[3], (Cout2,), dtype=jnp.float32)
    be2 = 0.1 * jax.random.normal(kk[4], (Cout2,), dtype=jnp.float32)
    m2 = 0.1 * jax.random.normal(kk[5], (Cout2,), dtype=jnp.float32)
    v2 = jnp.abs(1.0 + 0.1 * jax.random.normal(kk[6], (Cout2,), dtype=jnp.float32))
    ref2 = conv_block_reference_nhwc(x2, wt2, b2, g2, be2, m2, v2)
    out2 = conv_block_pallas(x2, wt2, b2, g2, be2, m2, v2)     # bf16 default
    out2 = jax.block_until_ready(out2)
    assert out2.shape == (N2, H2, W2, Cout2)
    assert jnp.allclose(out2.astype(jnp.float32), ref2, atol=4e-2, rtol=4e-2), \
        f"test4 max err {jnp.max(jnp.abs(out2.astype(jnp.float32) - ref2))}"

    # 5) PyTorch-style NCHW adapter.
    out_nchw = conv_block_pallas_nchw(x_nchw, weight, bias, gamma, beta,
                                      running_mean, running_var,
                                      mxu_dtype=jnp.float32,
                                      out_dtype=jnp.float32)
    out_nchw = jax.block_until_ready(out_nchw)
    assert out_nchw.shape == (N, C_out, H, W)
    assert jnp.allclose(out_nchw, jnp.transpose(ref, (0, 3, 1, 2)),
                        atol=1e-4, rtol=1e-4)

    print("KERNEL_OK")
</pallas_src>

<mosaic_0001>
module attributes {stable_mosaic.version = 11 : i64} {
  func.func @_conv3x3_bn_relu_kernel(%arg0: i32, %arg1: i32, %arg2: i32, %arg3: memref<1x1x576x4xf32, #tpu.memory_space<vmem>>, %arg4: memref<9x4x128xf32, #tpu.memory_space<vmem>>, %arg5: memref<1x128xf32, #tpu.memory_space<vmem>>, %arg6: memref<1x1x16x16x128xf32, #tpu.memory_space<vmem>>) attributes {dimension_semantics = [#tpu.dimension_semantics<parallel>, #tpu.dimension_semantics<parallel>, #tpu.dimension_semantics<arbitrary>], iteration_bounds = array<i64: 2, 1, 1>, scalar_prefetch = 0 : i64, scratch_operands = 0 : i64, tpu.core_type = #tpu.core_type<tc>, window_params = [{transform_indices = @transform_0, window_bounds = array<i64: 1, 1, 576, 4>}, {transform_indices = @transform_1, window_bounds = array<i64: 9, 4, 128>}, {transform_indices = @transform_2, window_bounds = array<i64: 1, 128>}, {transform_indices = @transform_3, window_bounds = array<i64: 1, 1, 16, 16, 128>}]} {
    %c0 = arith.constant 0 : index
    %c0_0 = arith.constant 0 : index
    %c0_1 = arith.constant 0 : index
    %c0_2 = arith.constant 0 : index
    %0 = vector.load %arg3[%c0, %c0_0, %c0_1, %c0_2] : memref<1x1x576x4xf32, #tpu.memory_space<vmem>>, vector<1x1x512x4xf32>
    %1 = vector.shape_cast %0 : vector<1x1x512x4xf32> to vector<512x4xf32>
    %c0_3 = arith.constant 0 : index
    %c0_4 = arith.constant 0 : index
    %c0_5 = arith.constant 0 : index
    %2 = vector.load %arg4[%c0_3, %c0_4, %c0_5] : memref<9x4x128xf32, #tpu.memory_space<vmem>>, vector<1x4x128xf32>
    %3 = vector.shape_cast %2 : vector<1x4x128xf32> to vector<4x128xf32>
    %cst = arith.constant dense<0.000000e+00> : vector<512x128xf32>
    %4 = tpu.matmul %1, %3, %cst {dimension_numbers = #tpu.dot_dimension_numbers<[1], [0], [0], [1], [0, 0, 1, 1], [], []>} : vector<512x4xf32>, vector<4x128xf32>, vector<512x128xf32> -> vector<512x128xf32>
    %c1 = arith.constant 1 : index
    %c0_6 = arith.constant 0 : index
    %c0_7 = arith.constant 0 : index
    %5 = vector.load %arg4[%c1, %c0_6, %c0_7] : memref<9x4x128xf32, #tpu.memory_space<vmem>>, vector<1x4x128xf32>
    %6 = vector.shape_cast %5 : vector<1x4x128xf32> to vector<4x128xf32>
    %cst_8 = arith.constant dense<0.000000e+00> : vector<512x128xf32>
    %7 = tpu.matmul %1, %6, %cst_8 {dimension_numbers = #tpu.dot_dimension_numbers<[1], [0], [0], [1], [0, 0, 1, 1], [], []>} : vector<512x4xf32>, vector<4x128xf32>, vector<512x128xf32> -> vector<512x128xf32>
    %c2 = arith.constant 2 : index
    %c0_9 = arith.constant 0 : index
    %c0_10 = arith.constant 0 : index
    %8 = vector.load %arg4[%c2, %c0_9, %c0_10] : memref<9x4x128xf32, #tpu.memory_space<vmem>>, vector<1x4x128xf32>
    %9 = vector.shape_cast %8 : vector<1x4x128xf32> to vector<4x128xf32>
    %cst_11 = arith.constant dense<0.000000e+00> : vector<512x128xf32>
    %10 = tpu.matmul %1, %9, %cst_11 {dimension_numbers = #tpu.dot_dimension_numbers<[1], [0], [0], [1], [0, 0, 1, 1], [], []>} : vector<512x4xf32>, vector<4x128xf32>, vector<512x128xf32> -> vector<512x128xf32>
    %c0_12 = arith.constant 0 : index
    %c0_13 = arith.constant 0 : index
    %c32 = arith.constant 32 : index
    %c0_14 = arith.constant 0 : index
    %11 = vector.load %arg3[%c0_12, %c0_13, %c32, %c0_14] : memref<1x1x576x4xf32, #tpu.memory_space<vmem>>, vector<1x1x512x4xf32>
    %12 = vector.shape_cast %11 : vector<1x1x512x4xf32> to vector<512x4xf32>
    %c3 = arith.constant 3 : index
    %c0_15 = arith.constant 0 : index
    %c0_16 = arith.constant 0 : index
    %13 = vector.load %arg4[%c3, %c0_15, %c0_16] : memref<9x4x128xf32, #tpu.memory_space<vmem>>, vector<1x4x128xf32>
    %14 = vector.shape_cast %13 : vector<1x4x128xf32> to vector<4x128xf32>
    %cst_17 = arith.constant dense<0.000000e+00> : vector<512x128xf32>
    %15 = tpu.matmul %12, %14, %cst_17 {dimension_numbers = #tpu.dot_dimension_numbers<[1], [0], [0], [1], [0, 0, 1, 1], [], []>} : vector<512x4xf32>, vector<4x128xf32>, vector<512x128xf32> -> vector<512x128xf32>
    %16 = arith.addf %4, %15 : vector<512x128xf32>
    %c4 = arith.constant 4 : index
    %c0_18 = arith.constant 0 : index
    %c0_19 = arith.constant 0 : index
    %17 = vector.load %arg4[%c4, %c0_18, %c0_19] : memref<9x4x128xf32, #tpu.memory_space<vmem>>, vector<1x4x128xf32>
    %18 = vector.shape_cast %17 : vector<1x4x128xf32> to vector<4x128xf32>
    %cst_20 = arith.constant dense<0.000000e+00> : vector<512x128xf32>
    %19 = tpu.matmul %12, %18, %cst_20 {dimension_numbers = #tpu.dot_dimension_numbers<[1], [0], [0], [1], [0, 0, 1, 1], [], []>} : vector<512x4xf32>, vector<4x128xf32>, vector<512x128xf32> -> vector<512x128xf32>
    %20 = arith.addf %7, %19 : vector<512x128xf32>
    %c5 = arith.constant 5 : index
    %c0_21 = arith.constant 0 : index
    %c0_22 = arith.constant 0 : index
    %21 = vector.load %arg4[%c5, %c0_21, %c0_22] : memref<9x4x128xf32, #tpu.memory_space<vmem>>, vector<1x4x128xf32>
    %22 = vector.shape_cast %21 : vector<1x4x128xf32> to vector<4x128xf32>
    %cst_23 = arith.constant dense<0.000000e+00> : vector<512x128xf32>
    %23 = tpu.matmul %12, %22, %cst_23 {dimension_numbers = #tpu.dot_dimension_numbers<[1], [0], [0], [1], [0, 0, 1, 1], [], []>} : vector<512x4xf32>, vector<4x128xf32>, vector<512x128xf32> -> vector<512x128xf32>
    %24 = arith.addf %10, %23 : vector<512x128xf32>
    %c0_24 = arith.constant 0 : index
    %c0_25 = arith.constant 0 : index
    %c64 = arith.constant 64 : index
    %c0_26 = arith.constant 0 : index
    %25 = vector.load %arg3[%c0_24, %c0_25, %c64, %c0_26] : memref<1x1x576x4xf32, #tpu.memory_space<vmem>>, vector<1x1x512x4xf32>
    %26 = vector.shape_cast %25 : vector<1x1x512x4xf32> to vector<512x4xf32>
    %c6 = arith.constant 6 : index
    %c0_27 = arith.constant 0 : index
    %c0_28 = arith.constant 0 : index
    %27 = vector.load %arg4[%c6, %c0_27, %c0_28] : memref<9x4x128xf32, #tpu.memory_space<vmem>>, vector<1x4x128xf32>
    %28 = vector.shape_cast %27 : vector<1x4x128xf32> to vector<4x128xf32>
    %cst_29 = arith.constant dense<0.000000e+00> : vector<512x128xf32>
    %29 = tpu.matmul %26, %28, %cst_29 {dimension_numbers = #tpu.dot_dimension_numbers<[1], [0], [0], [1], [0, 0, 1, 1], [], []>} : vector<512x4xf32>, vector<4x128xf32>, vector<512x128xf32> -> vector<512x128xf32>
    %30 = arith.addf %16, %29 : vector<512x128xf32>
    %c7 = arith.constant 7 : index
    %c0_30 = arith.constant 0 : index
    %c0_31 = arith.constant 0 : index
    %31 = vector.load %arg4[%c7, %c0_30, %c0_31] : memref<9x4x128xf32, #tpu.memory_space<vmem>>, vector<1x4x128xf32>
    %32 = vector.shape_cast %31 : vector<1x4x128xf32> to vector<4x128xf32>
    %cst_32 = arith.constant dense<0.000000e+00> : vector<512x128xf32>
    %33 = tpu.matmul %26, %32, %cst_32 {dimension_numbers = #tpu.dot_dimension_numbers<[1], [0], [0], [1], [0, 0, 1, 1], [], []>} : vector<512x4xf32>, vector<4x128xf32>, vector<512x128xf32> -> vector<512x128xf32>
    %34 = arith.addf %20, %33 : vector<512x128xf32>
    %c8 = arith.constant 8 : index
    %c0_33 = arith.constant 0 : index
    %c0_34 = arith.constant 0 : index
    %35 = vector.load %arg4[%c8, %c0_33, %c0_34] : memref<9x4x128xf32, #tpu.memory_space<vmem>>, vector<1x4x128xf32>
    %36 = vector.shape_cast %35 : vector<1x4x128xf32> to vector<4x128xf32>
    %cst_35 = arith.constant dense<0.000000e+00> : vector<512x128xf32>
    %37 = tpu.matmul %26, %36, %cst_35 {dimension_numbers = #tpu.dot_dimension_numbers<[1], [0], [0], [1], [0, 0, 1, 1], [], []>} : vector<512x4xf32>, vector<4x128xf32>, vector<512x128xf32> -> vector<512x128xf32>
    %38 = arith.addf %24, %37 : vector<512x128xf32>
    %39 = vector.shape_cast %30 : vector<512x128xf32> to vector<16x32x128xf32>
    %40 = vector.shape_cast %34 : vector<512x128xf32> to vector<16x32x128xf32>
    %41 = vector.shape_cast %38 : vector<512x128xf32> to vector<16x32x128xf32>
    %42 = vector.extract_strided_slice %39 {offsets = [0, 0, 0], sizes = [16, 16, 128], strides = [1, 1, 1]} : vector<16x32x128xf32> to vector<16x16x128xf32>
    %43 = vector.extract_strided_slice %40 {offsets = [0, 1, 0], sizes = [16, 16, 128], strides = [1, 1, 1]} : vector<16x32x128xf32> to vector<16x16x128xf32>
    %44 = arith.addf %42, %43 : vector<16x16x128xf32>
    %45 = vector.extract_strided_slice %41 {offsets = [0, 2, 0], sizes = [16, 16, 128], strides = [1, 1, 1]} : vector<16x32x128xf32> to vector<16x16x128xf32>
    %46 = arith.addf %44, %45 : vector<16x16x128xf32>
    %c0_36 = arith.constant 0 : index
    %c0_37 = arith.constant 0 : index
    %47 = vector.load %arg5[%c0_36, %c0_37] : memref<1x128xf32, #tpu.memory_space<vmem>>, vector<1x128xf32>
    %48 = vector.shape_cast %47 : vector<1x128xf32> to vector<1x1x128xf32>
    %49 = vector.broadcast %48 : vector<1x1x128xf32> to vector<16x16x128xf32>
    %50 = arith.addf %46, %49 : vector<16x16x128xf32>
    %cst_38 = arith.constant 0.000000e+00 : f32
    %51 = vector.broadcast %cst_38 : f32 to vector<16x16x128xf32>
    %52 = arith.maximumf %50, %51 : vector<16x16x128xf32>
    %c0_39 = arith.constant 0 : index
    %c0_40 = arith.constant 0 : index
    %c0_41 = arith.constant 0 : index
    %c0_42 = arith.constant 0 : index
    %c0_43 = arith.constant 0 : index
    %53 = vector.load %arg6[%c0_39, %c0_40, %c0_41, %c0_42, %c0_43] : memref<1x1x16x16x128xf32, #tpu.memory_space<vmem>>, vector<1x1x16x16x128xf32>
    %54 = vector.shape_cast %53 : vector<1x1x16x16x128xf32> to vector<16x16x128xf32>
    %55 = vector.shape_cast %52 : vector<16x16x128xf32> to vector<1x1x16x16x128xf32>
    tpu.vector_store %arg6[%c0_39, %c0_40, %c0_41, %c0_42, %c0_43], %55 {strides = array<i32>} : memref<1x1x16x16x128xf32, #tpu.memory_space<vmem>>, vector<1x1x16x16x128xf32>,
    return
  }
  func.func @transform_0(%arg0: i32, %arg1: i32, %arg2: i32) -> (i32, i32, i32, i32) {
    %c0_i32 = arith.constant 0 : i32
    %c0_i32_0 = arith.constant 0 : i32
    %c0_i32_1 = arith.constant 0 : i32
    return %arg0, %arg1, %c0_i32, %c0_i32_0 : i32, i32, i32, i32
  }
  func.func @transform_1(%arg0: i32, %arg1: i32, %arg2: i32) -> (i32, i32, i32) {
    %c0_i32 = arith.constant 0 : i32
    %c0_i32_0 = arith.constant 0 : i32
    %c0_i32_1 = arith.constant 0 : i32
    return %c0_i32, %c0_i32_0, %arg2 : i32, i32, i32
  }
  func.func @transform_2(%arg0: i32, %arg1: i32, %arg2: i32) -> (i32, i32) {
    %c0_i32 = arith.constant 0 : i32
    %c0_i32_0 = arith.constant 0 : i32
    return %c0_i32, %arg2 : i32, i32
  }
  func.func @transform_3(%arg0: i32, %arg1: i32, %arg2: i32) -> (i32, i32, i32, i32, i32) {
    %c0_i32 = arith.constant 0 : i32
    %c0_i32_0 = arith.constant 0 : i32
    %c0_i32_1 = arith.constant 0 : i32
    return %arg0, %arg1, %c0_i32, %c0_i32_0, %arg2 : i32, i32, i32, i32, i32
  }
}

</mosaic_0001>

<llo_original>
// kernel: tpu_custom_call.1
$region0: #{tpu_custom_call.1}
  #allocation0 [shape = 'u32[]', space=smem, size = 0x4, offset = 0x4, fixed_abs, tag = 'smem constant byte address 0x4 - core index']
  #allocation1 [shape = 'u32[72,128]{1,0:T(1,128)}', space=vmem, size = 0x9000, scoped, tag = 'internal scratch']
  %s0 = inlined_call_operand.vmem [shape: f32[2,1,576,4], index: 0, kind: input, shape index: {}]
  %s1 = inlined_call_operand.vmem [shape: f32[9,4,128], index: 1, kind: input, shape index: {}]
  %s2 = inlined_call_operand.vmem [shape: f32[1,128], index: 2, kind: input, shape index: {}]
  %s3 = inlined_call_operand.hbm [shape: f32[2,1,16,16,128], index: 3, kind: output, shape index: {}]
  %s4 = sld [smem:[#allocation0]]
  $region45: #{tpu_custom_call.1} parent=0
    _
  %s6 = ssub.s32 1, %s4
  %s7 = scalar_select 0, %s6, %s4
  $region1: #{tpu_custom_call.1} parent=0
    #allocation2 [shape = 'u8[262144]{0}', space=vmem, size = 0x40000, scoped, tag = 'output window, operand 0']
    #allocation3 [shape = 's32[2]{0}', space=sflag, size = 0x8, scoped, tag = 'scoped memory for tpu_custom_call.1']
    %8 = vsyncpa [#allocation3], 0
    %s9 = scalar_lea.sflag [#allocation3], 1
    %10 = vsyncpa %s9, 0
    loop: start=0, step=1, limit=4
    $region2: #{tpu_custom_call.1} parent=1 // loop_pre_header
      _
    $region3: #{tpu_custom_call.1} parent=1 // loop_header
      %s12 = sphi 0, %s16
      %p13 = scmp.ge.s32.totalorder %s12, 4
      %s19 = sphi 0, %s38
      %s20 = sphi 0, %s34
      %s21 = sphi 0, %s30
      %s22 = sphi 0, %s19
      %s23 = sphi 0, %s20
      %s24 = sphi 0, %s21
      %s25 = sphi 0, %s22
      %s26 = sphi 0, %s23
      %s27 = sphi 0, %s24
      %s43 = sphi 0, %s45
      %s46 = sphi 0, %s43
      %s47 = sphi 0, %s46
      %s63 = sphi 0, %s47
      %s69 = sphi 0, %s71
      %s72 = sphi 0, %s69
      %s73 = sphi 0, %s72
      %s89 = sphi 0, %s73
      %s95 = sphi 0, %s97
      %s98 = sphi 0, %s95
      %s99 = sphi 0, %s98
      %s115 = sphi 0, %s99
      %s125 = sphi 0, %s127
      %s128 = sphi 0, %s125
      %s129 = sphi 0, %s128
      %s145 = sphi 0, %s129
    $region4: #{tpu_custom_call.1} parent=1 // loop_header_branch
      %15 = sbr.rel (%p13) target = $region8
    $region5: #{tpu_custom_call.1} parent=1 // loop_body
      %s17 = ssub.s32 %s12, 1
      %s18 = ssub.s32 %s12, 2
      %s28 = sadd.s32 1, %s21
      %p29 = scmp.ge.s32.totalorder %s28, 1
      %s30 = scalar_select %p29, 0, %s28
      %s31 = sadd.s32 1, %s20
      %s32 = scalar_select %p29, %s31, %s20
      %p33 = scmp.ge.s32.totalorder %s32, 1
      %s34 = scalar_select %p33, 0, %s32
      %s35 = sadd.s32 1, %s19
      %s36 = scalar_select %p33, %s35, %s19
      %p37 = scmp.ge.s32.totalorder %s36, 2
      %s38 = scalar_select %p37, 0, %s36
      %s39 = ssub.s32 %s19, %s38
      %s40 = ssub.s32 %s20, %s34
      %s41 = sor.u32 %s39, %s40
      %p42 = scmp.eq.s32.totalorder %s41, 0
      %s44 = sadd.s32 %s43, 1
      %s45 = scalar_select %p42, %s43, %s44
      %p48 = pneg %p42
      %p49 = scmp.eq.s32.totalorder %s12, 1
      %p50 = por %p48, %p49
      %p51 = scmp.ne.s32.totalorder %s43, %s46
      %p52 = scmp.eq.s32.totalorder %s12, 0
      %p53 = por %p51, %p52
      %p54 = scmp.ne.s32.totalorder %s43, %s46
      %p55 = scmp.eq.s32.totalorder %s17, 1
      %p56 = por %p54, %p55
      %p57 = scmp.ne.s32.totalorder %s46, %s47
      %p58 = scmp.eq.s32.totalorder %s17, 0
      %p59 = por %p57, %p58
      %p60 = scmp.ne.s32.totalorder %s46, %s47
      %p61 = scmp.eq.s32.totalorder %s18, 1
      %p62 = por %p60, %p61
      %p64 = scmp.ne.s32.totalorder %s47, %s63
      %p65 = scmp.eq.s32.totalorder %s18, 0
      %p66 = por %p64, %p65
      %s67 = ssub.s32 %s21, %s30
      %p68 = scmp.eq.s32.totalorder %s67, 0
      %s70 = sadd.s32 %s69, 1
      %s71 = scalar_select %p68, %s69, %s70
      %p74 = pneg %p68
      %p75 = scmp.eq.s32.totalorder %s12, 1
      %p76 = por %p74, %p75
      %p77 = scmp.ne.s32.totalorder %s69, %s72
      %p78 = scmp.eq.s32.totalorder %s12, 0
      %p79 = por %p77, %p78
      %p80 = scmp.ne.s32.totalorder %s69, %s72
      %p81 = scmp.eq.s32.totalorder %s17, 1
      %p82 = por %p80, %p81
      %p83 = scmp.ne.s32.totalorder %s72, %s73
      %p84 = scmp.eq.s32.totalorder %s17, 0
      %p85 = por %p83, %p84
      %p86 = scmp.ne.s32.totalorder %s72, %s73
      %p87 = scmp.eq.s32.totalorder %s18, 1
      %p88 = por %p86, %p87
      %p90 = scmp.ne.s32.totalorder %s73, %s89
      %p91 = scmp.eq.s32.totalorder %s18, 0
      %p92 = por %p90, %p91
      %s93 = ssub.s32 %s21, %s30
      %p94 = scmp.eq.s32.totalorder %s93, 0
      %s96 = sadd.s32 %s95, 1
      %s97 = scalar_select %p94, %s95, %s96
      %p100 = pneg %p94
      %p101 = scmp.eq.s32.totalorder %s12, 1
      %p102 = por %p100, %p101
      %p103 = scmp.ne.s32.totalorder %s95, %s98
      %p104 = scmp.eq.s32.totalorder %s12, 0
      %p105 = por %p103, %p104
      %p106 = scmp.ne.s32.totalorder %s95, %s98
      %p107 = scmp.eq.s32.totalorder %s17, 1
      %p108 = por %p106, %p107
      %p109 = scmp.ne.s32.totalorder %s98, %s99
      %p110 = scmp.eq.s32.totalorder %s17, 0
      %p111 = por %p109, %p110
      %p112 = scmp.ne.s32.totalorder %s98, %s99
      %p113 = scmp.eq.s32.totalorder %s18, 1
      %p114 = por %p112, %p113
      %p116 = scmp.ne.s32.totalorder %s99, %s115
      %p117 = scmp.eq.s32.totalorder %s18, 0
      %p118 = por %p116, %p117
      %s119 = ssub.s32 %s19, %s38
      %s120 = ssub.s32 %s20, %s34
      %s121 = sor.u32 %s119, %s120
      %s122 = ssub.s32 %s21, %s30
      %s123 = sor.u32 %s121, %s122
      %p124 = scmp.eq.s32.totalorder %s123, 0
      %s126 = sadd.s32 %s125, 1
      %s127 = scalar_select %p124, %s125, %s126
      %p130 = pneg %p124
      %p131 = scmp.eq.s32.totalorder %s12, 1
      %p132 = por %p130, %p131
      %p133 = scmp.ne.s32.totalorder %s125, %s128
      %p134 = scmp.eq.s32.totalorder %s12, 0
      %p135 = por %p133, %p134
      %p136 = scmp.ne.s32.totalorder %s125, %s128
      %p137 = scmp.eq.s32.totalorder %s17, 1
      %p138 = por %p136, %p137
      %p139 = scmp.ne.s32.totalorder %s128, %s129
      %p140 = scmp.eq.s32.totalorder %s17, 0
      %p141 = por %p139, %p140
      %p142 = scmp.ne.s32.totalorder %s128, %s129
      %p143 = scmp.eq.s32.totalorder %s18, 1
      %p144 = por %p142, %p143
      %p146 = scmp.ne.s32.totalorder %s129, %s145
      %p147 = scmp.eq.s32.totalorder %s18, 0
      %p148 = por %p146, %p147
      %p149 = scmp.le.s32.totalorder 1, %s12
      %p150 = scmp.lt.s32.totalorder %s12, 3
      %p151 = pnand %p149, %p150
      %p152 = pneg %p151
      // Predicated region
      $region9: #{tpu_custom_call.1} parent=5 // pred_check
        _
      $region10: #{tpu_custom_call.1} parent=5 // pred_check_branch
        %154 = sbr.rel (%p151) target = $region12
      $region11: #{tpu_custom_call.1} parent=5 // pred_region
        %s155 = ssub.s32 %s12, 1
        // Predicated region
        $region13: #{tpu_custom_call.1} parent=11 // pred_check
          %p156 = pneg %p85
        $region14: #{tpu_custom_call.1} parent=11 // pred_check_branch
          %158 = sbr.rel (%p156) target = $region16
        $region15: #{tpu_custom_call.1} parent=11 // pred_region
          %p159 = scmp.lt.s32.totalorder %s24, 0
          %s160 = scalar_select %p159, %s24, 0
          %s161 = smul.addr %s160, 4
          %s162 = scalar_lea.vmem %s1, %s161
        $region16: #{tpu_custom_call.1} parent=11 // pred_fallthru
          _
        // Predicated region
        $region17: #{tpu_custom_call.1} parent=11 // pred_check
          %p163 = pneg %p111
        $region18: #{tpu_custom_call.1} parent=11 // pred_check_branch
          %165 = sbr.rel (%p163) target = $region20
        $region19: #{tpu_custom_call.1} parent=11 // pred_region
          %p166 = scmp.lt.s32.totalorder %s24, 0
          %s167 = scalar_select %p166, %s24, 0
          %s168 = scalar_lea.vmem %s2, %s167
        $region20: #{tpu_custom_call.1} parent=11 // pred_fallthru
          _
      $region12: #{tpu_custom_call.1} parent=5 // pred_fallthru
        _
      %p169 = scmp.lt.s32.totalorder %s12, 2
      // Predicated region
      $region21: #{tpu_custom_call.1} parent=5 // pred_check
        %p170 = pneg %p169
      $region22: #{tpu_custom_call.1} parent=5 // pred_check_branch
        %172 = sbr.rel (%p170) target = $region24
      $region23: #{tpu_custom_call.1} parent=5 // pred_region
        // Predicated region
        $region25: #{tpu_custom_call.1} parent=23 // pred_check
          %p173 = pneg %p53
        $region26: #{tpu_custom_call.1} parent=23 // pred_check_branch
          %175 = sbr.rel (%p173) target = $region28
        $region27: #{tpu_custom_call.1} parent=23 // pred_region
          %p176 = scmp.lt.s32.totalorder %s19, 1
          %s177 = scalar_select %p176, %s19, 1
          %p178 = scmp.lt.s32.totalorder %s20, 0
          %s179 = scalar_select %p178, %s20, 0
          %s180 = smul.addr %s179, 72
          %s181 = smul.addr %s177, 72
          %s182 = sadd.s32 %s180, %s181
          %s183 = smul.addr %s182, 8
          %s184 = scalar_lea.vmem %s0, %s183
        $region28: #{tpu_custom_call.1} parent=23 // pred_fallthru
          _
      $region24: #{tpu_custom_call.1} parent=5 // pred_fallthru
        _
      %p185 = scmp.le.s32.totalorder 1, %s12
      %p186 = scmp.lt.s32.totalorder %s12, 3
      %p187 = pnand %p185, %p186
      %p188 = pneg %p187
      // Predicated region
      $region29: #{tpu_custom_call.1} parent=5 // pred_check
        _
      $region30: #{tpu_custom_call.1} parent=5 // pred_check_branch
        %190 = sbr.rel (%p187) target = $region32
      $region31: #{tpu_custom_call.1} parent=5 // pred_region
        %s191 = ssub.s32 %s12, 1
        %p192 = scmp.lt.s32.totalorder %s22, 1
        %s193 = scalar_select %p192, %s22, 1
        %p194 = scmp.lt.s32.totalorder %s23, 0
        %s195 = scalar_select %p194, %s23, 0
        %s196 = smul.addr %s195, 72
        %s197 = smul.addr %s193, 72
        %s198 = sadd.s32 %s196, %s197
        %s199 = smul.addr %s198, 8
        %s200 = scalar_lea.vmem %s0, %s199
        %p201 = pneg %p59
        %p202 = pneg %p56
        %p203 = scmp.lt.s32.totalorder %s24, 0
        %s204 = scalar_select %p203, %s24, 0
        %s205 = smul.addr %s204, 4
        %s206 = scalar_lea.vmem %s1, %s205
        %p207 = pneg %p85
        %p208 = pneg %p82
        %p209 = scmp.lt.s32.totalorder %s24, 0
        %s210 = scalar_select %p209, %s24, 0
        %s211 = scalar_lea.vmem %s2, %s210
        %p212 = pneg %p111
        %p213 = pneg %p108
        %p214 = pneg %p141
        %p215 = pneg %p138
        %s216 = sand.u32 %s128, 1
        %s217 = scalar_lea.sflag [#allocation3], %s216
        %s218 = sand.u32 %s128, 1
        %s219 = smul.addr %s218, 256
        %s220 = scalar_lea.vmem [#allocation2], %s219
        %p221 = scmp.lt.s32.totalorder %s22, 1
        %s222 = scalar_select %p221, %s22, 1
        %p223 = scmp.lt.s32.totalorder %s23, 0
        %s224 = scalar_select %p223, %s23, 0
        %s225 = smul.addr %s224, 72
        %s226 = smul.addr %s222, 72
        %s227 = sadd.s32 %s225, %s226
        %s228 = smul.addr %s227, 8
        %s229 = scalar_lea.vmem %s0, %s228
        %p230 = scmp.lt.s32.totalorder %s24, 0
        %s231 = scalar_select %p230, %s24, 0
        %s232 = smul.addr %s231, 4
        %s233 = scalar_lea.vmem %s1, %s232
        %p234 = scmp.lt.s32.totalorder %s24, 0
        %s235 = scalar_select %p234, %s24, 0
        %s236 = scalar_lea.vmem %s2, %s235
        %v237 = vld [vmem:[%s229] sm:$0xff]
        %v238 = vld [vmem:[%s229 + $0x8] sm:$0xff]
        %v239 = vld [vmem:[%s229 + $0x10] sm:$0xff]
        %v240 = vld [vmem:[%s229 + $0x18] sm:$0xff]
        %v241 = vld [vmem:[%s229 + $0x20] sm:$0xff]
        %v242 = vld [vmem:[%s229 + $0x28] sm:$0xff]
        %v243 = vld [vmem:[%s229 + $0x30] sm:$0xff]
        %v244 = vld [vmem:[%s229 + $0x38] sm:$0xff]
        %v245 = vld [vmem:[%s229 + $0x40] sm:$0xff]
        %v246 = vld [vmem:[%s229 + $0x48] sm:$0xff]
        %v247 = vld [vmem:[%s229 + $0x50] sm:$0xff]
        %v248 = vld [vmem:[%s229 + $0x58] sm:$0xff]
        %v249 = vld [vmem:[%s229 + $0x60] sm:$0xff]
        %v250 = vld [vmem:[%s229 + $0x68] sm:$0xff]
        %v251 = vld [vmem:[%s229 + $0x70] sm:$0xff]
        %v252 = vld [vmem:[%s229 + $0x78] sm:$0xff]
        %v253 = vld [vmem:[%s229 + $0x80] sm:$0xff]
        %v254 = vld [vmem:[%s229 + $0x88] sm:$0xff]
        %v255 = vld [vmem:[%s229 + $0x90] sm:$0xff]
        %v256 = vld [vmem:[%s229 + $0x98] sm:$0xff]
        %v257 = vld [vmem:[%s229 + $0xa0] sm:$0xff]
        %v258 = vld [vmem:[%s229 + $0xa8] sm:$0xff]
        %v259 = vld [vmem:[%s229 + $0xb0] sm:$0xff]
        %v260 = vld [vmem:[%s229 + $0xb8] sm:$0xff]
        %v261 = vld [vmem:[%s229 + $0xc0] sm:$0xff]
        %v262 = vld [vmem:[%s229 + $0xc8] sm:$0xff]
        %v263 = vld [vmem:[%s229 + $0xd0] sm:$0xff]
        %v264 = vld [vmem:[%s229 + $0xd8] sm:$0xff]
        %v265 = vld [vmem:[%s229 + $0xe0] sm:$0xff]
        %v266 = vld [vmem:[%s229 + $0xe8] sm:$0xff]
        %v267 = vld [vmem:[%s229 + $0xf0] sm:$0xff]
        %v268 = vld [vmem:[%s229 + $0xf8] sm:$0xff]
        %v269 = vld [vmem:[%s229 + $0x100] sm:$0xff]
        %v270 = vld [vmem:[%s229 + $0x108] sm:$0xff]
        %v271 = vld [vmem:[%s229 + $0x110] sm:$0xff]
        %v272 = vld [vmem:[%s229 + $0x118] sm:$0xff]
        %v273 = vld [vmem:[%s229 + $0x120] sm:$0xff]
        %v274 = vld [vmem:[%s229 + $0x128] sm:$0xff]
        %v275 = vld [vmem:[%s229 + $0x130] sm:$0xff]
        %v276 = vld [vmem:[%s229 + $0x138] sm:$0xff]
        %v277 = vld [vmem:[%s229 + $0x140] sm:$0xff]
        %v278 = vld [vmem:[%s229 + $0x148] sm:$0xff]
        %v279 = vld [vmem:[%s229 + $0x150] sm:$0xff]
        %v280 = vld [vmem:[%s229 + $0x158] sm:$0xff]
        %v281 = vld [vmem:[%s229 + $0x160] sm:$0xff]
        %v282 = vld [vmem:[%s229 + $0x168] sm:$0xff]
        %v283 = vld [vmem:[%s229 + $0x170] sm:$0xff]
        %v284 = vld [vmem:[%s229 + $0x178] sm:$0xff]
        %v285 = vld [vmem:[%s229 + $0x180] sm:$0xff]
        %v286 = vld [vmem:[%s229 + $0x188] sm:$0xff]
        %v287 = vld [vmem:[%s229 + $0x190] sm:$0xff]
        %v288 = vld [vmem:[%s229 + $0x198] sm:$0xff]
        %v289 = vld [vmem:[%s229 + $0x1a0] sm:$0xff]
        %v290 = vld [vmem:[%s229 + $0x1a8] sm:$0xff]
        %v291 = vld [vmem:[%s229 + $0x1b0] sm:$0xff]
        %v292 = vld [vmem:[%s229 + $0x1b8] sm:$0xff]
        %v293 = vld [vmem:[%s229 + $0x1c0] sm:$0xff]
        %v294 = vld [vmem:[%s229 + $0x1c8] sm:$0xff]
        %v295 = vld [vmem:[%s229 + $0x1d0] sm:$0xff]
        %v296 = vld [vmem:[%s229 + $0x1d8] sm:$0xff]
        %v297 = vld [vmem:[%s229 + $0x1e0] sm:$0xff]
        %v298 = vld [vmem:[%s229 + $0x1e8] sm:$0xff]
        %v299 = vld [vmem:[%s229 + $0x1f0] sm:$0xff]
        %v300 = vld [vmem:[%s229 + $0x1f8] sm:$0xff]
        %v301 = vld [vmem:[%s233] sm:$0xf]
        %s302 = scalar_lea.vmem %s233, 4
        %v303 = vld [vmem:[%s302] sm:$0xf]
        %s304 = scalar_lea.vmem %s233, 8
        %v305 = vld [vmem:[%s304] sm:$0xf]
        %v306 = vld [vmem:[%s229 + $0x200] sm:$0xff]
        %v307 = vld [vmem:[%s229 + $0x208] sm:$0xff]
        %v308 = vld [vmem:[%s229 + $0x210] sm:$0xff]
        %v309 = vld [vmem:[%s229 + $0x218] sm:$0xff]
        %s310 = scalar_lea.vmem %s233, 12
        %v311 = vld [vmem:[%s310] sm:$0xf]
        %vm312 = vcmask 31744
        %v314 = vsel %vm312, %v241, 0
        %v317 = vsel %vm312, %v242, 0
        %v320 = vsel %vm312, %v243, 0
        %v323 = vsel %vm312, %v244, 0
        %v326 = vsel %vm312, %v245, 0
        %v329 = vsel %vm312, %v246, 0
        %v332 = vsel %vm312, %v247, 0
        %v335 = vsel %vm312, %v248, 0
        %v338 = vsel %vm312, %v249, 0
        %v341 = vsel %vm312, %v250, 0
        %v344 = vsel %vm312, %v251, 0
        %v347 = vsel %vm312, %v252, 0
        %v350 = vsel %vm312, %v253, 0
        %v353 = vsel %vm312, %v254, 0
        %v356 = vsel %vm312, %v255, 0
        %v359 = vsel %vm312, %v256, 0
        %v362 = vsel %vm312, %v257, 0
        %v365 = vsel %vm312, %v258, 0
        %v368 = vsel %vm312, %v259, 0
        %v371 = vsel %vm312, %v260, 0
        %v374 = vsel %vm312, %v261, 0
        %v377 = vsel %vm312, %v262, 0
        %v380 = vsel %vm312, %v263, 0
        %v383 = vsel %vm312, %v264, 0
        %v386 = vsel %vm312, %v265, 0
        %v389 = vsel %vm312, %v266, 0
        %v392 = vsel %vm312, %v267, 0
        %v395 = vsel %vm312, %v268, 0
        %v398 = vsel %vm312, %v269, 0
        %v401 = vsel %vm312, %v270, 0
        %v404 = vsel %vm312, %v271, 0
        %v407 = vsel %vm312, %v272, 0
        %v410 = vsel %vm312, %v273, 0
        %v413 = vsel %vm312, %v274, 0
        %v416 = vsel %vm312, %v275, 0
        %v419 = vsel %vm312, %v276, 0
        %v422 = vsel %vm312, %v277, 0
        %v425 = vsel %vm312, %v278, 0
        %v428 = vsel %vm312, %v279, 0
        %v431 = vsel %vm312, %v280, 0
        %v434 = vsel %vm312, %v281, 0
        %v437 = vsel %vm312, %v282, 0
        %v440 = vsel %vm312, %v283, 0
        %v443 = vsel %vm312, %v284, 0
        %v446 = vsel %vm312, %v285, 0
        %v449 = vsel %vm312, %v286, 0
        %v452 = vsel %vm312, %v287, 0
        %v455 = vsel %vm312, %v288, 0
        %v458 = vsel %vm312, %v289, 0
        %v461 = vsel %vm312, %v290, 0
        %v464 = vsel %vm312, %v291, 0
        %v467 = vsel %vm312, %v292, 0
        %v470 = vsel %vm312, %v293, 0
        %v473 = vsel %vm312, %v294, 0
        %v476 = vsel %vm312, %v295, 0
        %v479 = vsel %vm312, %v296, 0
        %v482 = vsel %vm312, %v297, 0
        %v485 = vsel %vm312, %v298, 0
        %v488 = vsel %vm312, %v299, 0
        %v491 = vsel %vm312, %v300, 0
        %v494 = vsel %vm312, %v306, 0
        %v497 = vsel %vm312, %v307, 0
        %v500 = vsel %vm312, %v308, 0
        %v503 = vsel %vm312, %v309, 0
        %vm505 = vcmask 1043456
        %v507 = vsel %vm505, %v311, 0
        %509 = vmatpush.msra.mxu0 0.0
        %510 = vmatpush.msra.mxu0 0.0
        %511 = vmatpush.msra.mxu0 0.0
        %512 = vmatpush.msra.mxu0 0.0
        %513 = vmatpush.msra.mxu0 0.0
        %514 = vmatpush.msra.mxu0 0.0
        %515 = vmatpush.msra.mxu0 0.0
        %516 = vmatpush.msra.mxu0 0.0
        %517 = vmatpush.msra.mxu0 0.0
        %518 = vmatpush.msra.mxu0 0.0
        %519 = vmatpush.msra.mxu0 0.0
        %520 = vmatpush.msra.mxu0 0.0
        %521 = vmatpush.msra.mxu0 0.0
        %522 = vmatpush.msra.mxu0 0.0
        %523 = vmatpush.msra.mxu0 0.0
        %524 = vmatpush.msra.mxu0 %v507
        %525 = vmatmul.f32.gmra.mxu0 %v314
        %v526 = vpop.f32.mrf.mxu0
        %v527 = vadd.f32 0.0, %v526
        %528 = vmatmul.f32.gmra.mxu0 %v317
        %v529 = vpop.f32.mrf.mxu0
        %v530 = vadd.f32 0.0, %v529
        %531 = vmatmul.f32.gmra.mxu0 %v320
        %v532 = vpop.f32.mrf.mxu0
        %533 = vmatmul.f32.gmra.mxu0 %v323
        %v534 = vpop.f32.mrf.mxu0
        %535 = vmatmul.f32.gmra.mxu0 %v326
        %v536 = vpop.f32.mrf.mxu0
        %v537 = vadd.f32 0.0, %v536
        %538 = vmatmul.f32.gmra.mxu0 %v329
        %v539 = vpop.f32.mrf.mxu0
        %v540 = vadd.f32 0.0, %v539
        %541 = vmatmul.f32.gmra.mxu0 %v332
        %v542 = vpop.f32.mrf.mxu0
        %543 = vmatmul.f32.gmra.mxu0 %v335
        %v544 = vpop.f32.mrf.mxu0
        %545 = vmatmul.f32.gmra.mxu0 %v338
        %v546 = vpop.f32.mrf.mxu0
        %v547 = vadd.f32 0.0, %v546
        %548 = vmatmul.f32.gmra.mxu0 %v341
        %v549 = vpop.f32.mrf.mxu0
        %v550 = vadd.f32 0.0, %v549
        %551 = vmatmul.f32.gmra.mxu0 %v344
        %v552 = vpop.f32.mrf.mxu0
        %553 = vmatmul.f32.gmra.mxu0 %v347
        %v554 = vpop.f32.mrf.mxu0
        %555 = vmatmul.f32.gmra.mxu0 %v350
        %v556 = vpop.f32.mrf.mxu0
        %v557 = vadd.f32 0.0, %v556
        %558 = vmatmul.f32.gmra.mxu0 %v353
        %v559 = vpop.f32.mrf.mxu0
        %v560 = vadd.f32 0.0, %v559
        %561 = vmatmul.f32.gmra.mxu0 %v356
        %v562 = vpop.f32.mrf.mxu0
        %563 = vmatmul.f32.gmra.mxu0 %v359
        %v564 = vpop.f32.mrf.mxu0
        %565 = vmatmul.f32.gmra.mxu0 %v362
        %v566 = vpop.f32.mrf.mxu0
        %v567 = vadd.f32 0.0, %v566
        %568 = vmatmul.f32.gmra.mxu0 %v365
        %v569 = vpop.f32.mrf.mxu0
        %v570 = vadd.f32 0.0, %v569
        %571 = vmatmul.f32.gmra.mxu0 %v368
        %v572 = vpop.f32.mrf.mxu0
        %573 = vmatmul.f32.gmra.mxu0 %v371
        %v574 = vpop.f32.mrf.mxu0
        %575 = vmatmul.f32.gmra.mxu0 %v374
        %v576 = vpop.f32.mrf.mxu0
        %v577 = vadd.f32 0.0, %v576
        %578 = vmatmul.f32.gmra.mxu0 %v377
        %v579 = vpop.f32.mrf.mxu0
        %v580 = vadd.f32 0.0, %v579
        %581 = vmatmul.f32.gmra.mxu0 %v380
        %v582 = vpop.f32.mrf.mxu0
        %583 = vmatmul.f32.gmra.mxu0 %v383
        %v584 = vpop.f32.mrf.mxu0
        %585 = vmatmul.f32.gmra.mxu0 %v386
        %v586 = vpop.f32.mrf.mxu0
        %v587 = vadd.f32 0.0, %v586
        %588 = vmatmul.f32.gmra.mxu0 %v389
        %v589 = vpop.f32.mrf.mxu0
        %v590 = vadd.f32 0.0, %v589
        %591 = vmatmul.f32.gmra.mxu0 %v392
        %v592 = vpop.f32.mrf.mxu0
        %593 = vmatmul.f32.gmra.mxu0 %v395
        %v594 = vpop.f32.mrf.mxu0
        %595 = vmatmul.f32.gmra.mxu0 %v398
        %v596 = vpop.f32.mrf.mxu0
        %v597 = vadd.f32 0.0, %v596
        %598 = vmatmul.f32.gmra.mxu0 %v401
        %v599 = vpop.f32.mrf.mxu0
        %v600 = vadd.f32 0.0, %v599
        %601 = vmatmul.f32.gmra.mxu0 %v404
        %v602 = vpop.f32.mrf.mxu0
        %603 = vmatmul.f32.gmra.mxu0 %v407
        %v604 = vpop.f32.mrf.mxu0
        %605 = vmatmul.f32.gmra.mxu0 %v410
        %v606 = vpop.f32.mrf.mxu0
        %v607 = vadd.f32 0.0, %v606
        %608 = vmatmul.f32.gmra.mxu0 %v413
        %v609 = vpop.f32.mrf.mxu0
        %v610 = vadd.f32 0.0, %v609
        %611 = vmatmul.f32.gmra.mxu0 %v416
        %v612 = vpop.f32.mrf.mxu0
        %613 = vmatmul.f32.gmra.mxu0 %v419
        %v614 = vpop.f32.mrf.mxu0
        %615 = vmatmul.f32.gmra.mxu0 %v422
        %v616 = vpop.f32.mrf.mxu0
        %v617 = vadd.f32 0.0, %v616
        %618 = vmatmul.f32.gmra.mxu0 %v425
        %v619 = vpop.f32.mrf.mxu0
        %v620 = vadd.f32 0.0, %v619
        %621 = vmatmul.f32.gmra.mxu0 %v428
        %v622 = vpop.f32.mrf.mxu0
        %623 = vmatmul.f32.gmra.mxu0 %v431
        %v624 = vpop.f32.mrf.mxu0
        %625 = vmatmul.f32.gmra.mxu0 %v434
        %v626 = vpop.f32.mrf.mxu0
        %v627 = vadd.f32 0.0, %v626
        %628 = vmatmul.f32.gmra.mxu0 %v437
        %v629 = vpop.f32.mrf.mxu0
        %v630 = vadd.f32 0.0, %v629
        %631 = vmatmul.f32.gmra.mxu0 %v440
        %v632 = vpop.f32.mrf.mxu0
        %633 = vmatmul.f32.gmra.mxu0 %v443
        %v634 = vpop.f32.mrf.mxu0
        %635 = vmatmul.f32.gmra.mxu0 %v446
        %v636 = vpop.f32.mrf.mxu0
        %v637 = vadd.f32 0.0, %v636
        %638 = vmatmul.f32.gmra.mxu0 %v449
        %v639 = vpop.f32.mrf.mxu0
        %v640 = vadd.f32 0.0, %v639
        %641 = vmatmul.f32.gmra.mxu0 %v452
        %v642 = vpop.f32.mrf.mxu0
        %643 = vmatmul.f32.gmra.mxu0 %v455
        %v644 = vpop.f32.mrf.mxu0
        %645 = vmatmul.f32.gmra.mxu0 %v458
        %v646 = vpop.f32.mrf.mxu0
        %v647 = vadd.f32 0.0, %v646
        %648 = vmatmul.f32.gmra.mxu0 %v461
        %v649 = vpop.f32.mrf.mxu0
        %v650 = vadd.f32 0.0, %v649
        %651 = vmatmul.f32.gmra.mxu0 %v464
        %v652 = vpop.f32.mrf.mxu0
        %653 = vmatmul.f32.gmra.mxu0 %v467
        %v654 = vpop.f32.mrf.mxu0
        %655 = vmatmul.f32.gmra.mxu0 %v470
        %v656 = vpop.f32.mrf.mxu0
        %v657 = vadd.f32 0.0, %v656
        %658 = vmatmul.f32.gmra.mxu0 %v473
        %v659 = vpop.f32.mrf.mxu0
        %v660 = vadd.f32 0.0, %v659
        %661 = vmatmul.f32.gmra.mxu0 %v476
        %v662 = vpop.f32.mrf.mxu0
        %663 = vmatmul.f32.gmra.mxu0 %v479
        %v664 = vpop.f32.mrf.mxu0
        %665 = vmatmul.f32.gmra.mxu0 %v482
        %v666 = vpop.f32.mrf.mxu0
        %v667 = vadd.f32 0.0, %v666
        %668 = vmatmul.f32.gmra.mxu0 %v485
        %v669 = vpop.f32.mrf.mxu0
        %v670 = vadd.f32 0.0, %v669
        %671 = vmatmul.f32.gmra.mxu0 %v488
        %v672 = vpop.f32.mrf.mxu0
        %673 = vmatmul.f32.gmra.mxu0 %v491
        %v674 = vpop.f32.mrf.mxu0
        %675 = vmatmul.f32.gmra.mxu0 %v494
        %v676 = vpop.f32.mrf.mxu0
        %v677 = vadd.f32 0.0, %v676
        %678 = vmatmul.f32.gmra.mxu0 %v497
        %v679 = vpop.f32.mrf.mxu0
        %v680 = vadd.f32 0.0, %v679
        %681 = vmatmul.f32.gmra.mxu0 %v500
        %v682 = vpop.f32.mrf.mxu0
        %683 = vmatmul.f32.gmra.mxu0 %v503
        %v684 = vpop.f32.mrf.mxu0
        %685 = vdwg.mxu0
        %v687 = vsel %vm312, %v237, 0
        %v690 = vsel %vm312, %v238, 0
        %v693 = vsel %vm312, %v239, 0
        %v696 = vsel %vm312, %v240, 0
        %v699 = vsel %vm505, %v301, 0
        %701 = vmatpush.msra.mxu0 0.0
        %702 = vmatpush.msra.mxu0 0.0
        %703 = vmatpush.msra.mxu0 0.0
        %704 = vmatpush.msra.mxu0 0.0
        %705 = vmatpush.msra.mxu0 0.0
        %706 = vmatpush.msra.mxu0 0.0
        %707 = vmatpush.msra.mxu0 0.0
        %708 = vmatpush.msra.mxu0 0.0
        %709 = vmatpush.msra.mxu0 0.0
        %710 = vmatpush.msra.mxu0 0.0
        %711 = vmatpush.msra.mxu0 0.0
        %712 = vmatpush.msra.mxu0 0.0
        %713 = vmatpush.msra.mxu0 0.0
        %714 = vmatpush.msra.mxu0 0.0
        %715 = vmatpush.msra.mxu0 0.0
        %716 = vmatpush.msra.mxu0 %v699
        %717 = vmatmul.f32.gmra.mxu0 %v687
        %v718 = vpop.f32.mrf.mxu0
        %v719 = vadd.f32 %v527, %v718
        %720 = vmatmul.f32.gmra.mxu0 %v690
        %v721 = vpop.f32.mrf.mxu0
        %v722 = vadd.f32 %v530, %v721
        %723 = vmatmul.f32.gmra.mxu0 %v693
        %v724 = vpop.f32.mrf.mxu0
        %725 = vmatmul.f32.gmra.mxu0 %v696
        %v726 = vpop.f32.mrf.mxu0
        %727 = vmatmul.f32.gmra.mxu0 %v314
        %v728 = vpop.f32.mrf.mxu0
        %v729 = vadd.f32 %v537, %v728
        %730 = vmatmul.f32.gmra.mxu0 %v317
        %v731 = vpop.f32.mrf.mxu0
        %v732 = vadd.f32 %v540, %v731
        %733 = vmatmul.f32.gmra.mxu0 %v320
        %v734 = vpop.f32.mrf.mxu0
        %735 = vmatmul.f32.gmra.mxu0 %v323
        %v736 = vpop.f32.mrf.mxu0
        %737 = vmatmul.f32.gmra.mxu0 %v326
        %v738 = vpop.f32.mrf.mxu0
        %v739 = vadd.f32 %v547, %v738
        %740 = vmatmul.f32.gmra.mxu0 %v329
        %v741 = vpop.f32.mrf.mxu0
        %v742 = vadd.f32 %v550, %v741
        %743 = vmatmul.f32.gmra.mxu0 %v332
        %v744 = vpop.f32.mrf.mxu0
        %745 = vmatmul.f32.gmra.mxu0 %v335
        %v746 = vpop.f32.mrf.mxu0
        %747 = vmatmul.f32.gmra.mxu0 %v338
        %v748 = vpop.f32.mrf.mxu0
        %v749 = vadd.f32 %v557, %v748
        %750 = vmatmul.f32.gmra.mxu0 %v341
        %v751 = vpop.f32.mrf.mxu0
        %v752 = vadd.f32 %v560, %v751
        %753 = vmatmul.f32.gmra.mxu0 %v344
        %v754 = vpop.f32.mrf.mxu0
        %755 = vmatmul.f32.gmra.mxu0 %v347
        %v756 = vpop.f32.mrf.mxu0
        %757 = vmatmul.f32.gmra.mxu0 %v350
        %v758 = vpop.f32.mrf.mxu0
        %v759 = vadd.f32 %v567, %v758
        %760 = vmatmul.f32.gmra.mxu0 %v353
        %v761 = vpop.f32.mrf.mxu0
        %v762 = vadd.f32 %v570, %v761
        %763 = vmatmul.f32.gmra.mxu0 %v356
        %v764 = vpop.f32.mrf.mxu0
        %765 = vmatmul.f32.gmra.mxu0 %v359
        %v766 = vpop.f32.mrf.mxu0
        %767 = vmatmul.f32.gmra.mxu0 %v362
        %v768 = vpop.f32.mrf.mxu0
        %v769 = vadd.f32 %v577, %v768
        %770 = vmatmul.f32.gmra.mxu0 %v365
        %v771 = vpop.f32.mrf.mxu0
        %v772 = vadd.f32 %v580, %v771
        %773 = vmatmul.f32.gmra.mxu0 %v368
        %v774 = vpop.f32.mrf.mxu0
        %775 = vmatmul.f32.gmra.mxu0 %v371
        %v776 = vpop.f32.mrf.mxu0
        %777 = vmatmul.f32.gmra.mxu0 %v374
        %v778 = vpop.f32.mrf.mxu0
        %v779 = vadd.f32 %v587, %v778
        %780 = vmatmul.f32.gmra.mxu0 %v377
        %v781 = vpop.f32.mrf.mxu0
        %v782 = vadd.f32 %v590, %v781
        %783 = vmatmul.f32.gmra.mxu0 %v380
        %v784 = vpop.f32.mrf.mxu0
        %785 = vmatmul.f32.gmra.mxu0 %v383
        %v786 = vpop.f32.mrf.mxu0
        %787 = vmatmul.f32.gmra.mxu0 %v386
        %v788 = vpop.f32.mrf.mxu0
        %v789 = vadd.f32 %v597, %v788
        %790 = vmatmul.f32.gmra.mxu0 %v389
        %v791 = vpop.f32.mrf.mxu0
        %v792 = vadd.f32 %v600, %v791
        %793 = vmatmul.f32.gmra.mxu0 %v392
        %v794 = vpop.f32.mrf.mxu0
        %795 = vmatmul.f32.gmra.mxu0 %v395
        %v796 = vpop.f32.mrf.mxu0
        %797 = vmatmul.f32.gmra.mxu0 %v398
        %v798 = vpop.f32.mrf.mxu0
        %v799 = vadd.f32 %v607, %v798
        %800 = vmatmul.f32.gmra.mxu0 %v401
        %v801 = vpop.f32.mrf.mxu0
        %v802 = vadd.f32 %v610, %v801
        %803 = vmatmul.f32.gmra.mxu0 %v404
        %v804 = vpop.f32.mrf.mxu0
        %805 = vmatmul.f32.gmra.mxu0 %v407
        %v806 = vpop.f32.mrf.mxu0
        %807 = vmatmul.f32.gmra.mxu0 %v410
        %v808 = vpop.f32.mrf.mxu0
        %v809 = vadd.f32 %v617, %v808
        %810 = vmatmul.f32.gmra.mxu0 %v413
        %v811 = vpop.f32.mrf.mxu0
        %v812 = vadd.f32 %v620, %v811
        %813 = vmatmul.f32.gmra.mxu0 %v416
        %v814 = vpop.f32.mrf.mxu0
        %815 = vmatmul.f32.gmra.mxu0 %v419
        %v816 = vpop.f32.mrf.mxu0
        %817 = vmatmul.f32.gmra.mxu0 %v422
        %v818 = vpop.f32.mrf.mxu0
        %v819 = vadd.f32 %v627, %v818
        %820 = vmatmul.f32.gmra.mxu0 %v425
        %v821 = vpop.f32.mrf.mxu0
        %v822 = vadd.f32 %v630, %v821
        %823 = vmatmul.f32.gmra.mxu0 %v428
        %v824 = vpop.f32.mrf.mxu0
        %825 = vmatmul.f32.gmra.mxu0 %v431
        %v826 = vpop.f32.mrf.mxu0
        %827 = vmatmul.f32.gmra.mxu0 %v434
        %v828 = vpop.f32.mrf.mxu0
        %v829 = vadd.f32 %v637, %v828
        %830 = vmatmul.f32.gmra.mxu0 %v437
        %v831 = vpop.f32.mrf.mxu0
        %v832 = vadd.f32 %v640, %v831
        %833 = vmatmul.f32.gmra.mxu0 %v440
        %v834 = vpop.f32.mrf.mxu0
        %835 = vmatmul.f32.gmra.mxu0 %v443
        %v836 = vpop.f32.mrf.mxu0
        %837 = vmatmul.f32.gmra.mxu0 %v446
        %v838 = vpop.f32.mrf.mxu0
        %v839 = vadd.f32 %v647, %v838
        %840 = vmatmul.f32.gmra.mxu0 %v449
        %v841 = vpop.f32.mrf.mxu0
        %v842 = vadd.f32 %v650, %v841
        %843 = vmatmul.f32.gmra.mxu0 %v452
        %v844 = vpop.f32.mrf.mxu0
        %845 = vmatmul.f32.gmra.mxu0 %v455
        %v846 = vpop.f32.mrf.mxu0
        %847 = vmatmul.f32.gmra.mxu0 %v458
        %v848 = vpop.f32.mrf.mxu0
        %v849 = vadd.f32 %v657, %v848
        %850 = vmatmul.f32.gmra.mxu0 %v461
        %v851 = vpop.f32.mrf.mxu0
        %v852 = vadd.f32 %v660, %v851
        %853 = vmatmul.f32.gmra.mxu0 %v464
        %v854 = vpop.f32.mrf.mxu0
        %855 = vmatmul.f32.gmra.mxu0 %v467
        %v856 = vpop.f32.mrf.mxu0
        %857 = vmatmul.f32.gmra.mxu0 %v470
        %v858 = vpop.f32.mrf.mxu0
        %v859 = vadd.f32 %v667, %v858
        %860 = vmatmul.f32.gmra.mxu0 %v473
        %v861 = vpop.f32.mrf.mxu0
        %v862 = vadd.f32 %v670, %v861
        %863 = vmatmul.f32.gmra.mxu0 %v476
        %v864 = vpop.f32.mrf.mxu0
        %865 = vmatmul.f32.gmra.mxu0 %v479
        %v866 = vpop.f32.mrf.mxu0
        %867 = vmatmul.f32.gmra.mxu0 %v482
        %v868 = vpop.f32.mrf.mxu0
        %v869 = vadd.f32 %v677, %v868
        %870 = vmatmul.f32.gmra.mxu0 %v485
        %v871 = vpop.f32.mrf.mxu0
        %v872 = vadd.f32 %v680, %v871
        %873 = vmatmul.f32.gmra.mxu0 %v488
        %v874 = vpop.f32.mrf.mxu0
        %875 = vmatmul.f32.gmra.mxu0 %v491
        %v876 = vpop.f32.mrf.mxu0
        %877 = vdwg.mxu0
        %s878 = scalar_lea.vmem %s233, 16
        %v879 = vld [vmem:[%s878] sm:$0xf]
        %v881 = vsel %vm505, %v879, 0
        %883 = vmatpush.msra.mxu0 0.0
        %884 = vmatpush.msra.mxu0 0.0
        %885 = vmatpush.msra.mxu0 0.0
        %886 = vmatpush.msra.mxu0 0.0
        %887 = vmatpush.msra.mxu0 0.0
        %888 = vmatpush.msra.mxu0 0.0
        %889 = vmatpush.msra.mxu0 0.0
        %890 = vmatpush.msra.mxu0 0.0
        %891 = vmatpush.msra.mxu0 0.0
        %892 = vmatpush.msra.mxu0 0.0
        %893 = vmatpush.msra.mxu0 0.0
        %894 = vmatpush.msra.mxu0 0.0
        %895 = vmatpush.msra.mxu0 0.0
        %896 = vmatpush.msra.mxu0 0.0
        %897 = vmatpush.msra.mxu0 0.0
        %898 = vmatpush.msra.mxu0 %v881
        %899 = vmatmul.f32.gmra.mxu0 %v314
        %v900 = vpop.f32.mrf.mxu0
        %v901 = vadd.f32 0.0, %v900
        %902 = vmatmul.f32.gmra.mxu0 %v317
        %v903 = vpop.f32.mrf.mxu0
        %v904 = vadd.f32 0.0, %v903
        %905 = vmatmul.f32.gmra.mxu0 %v320
        %v906 = vpop.f32.mrf.mxu0
        %v907 = vadd.f32 0.0, %v906
        %908 = vmatmul.f32.gmra.mxu0 %v323
        %v909 = vpop.f32.mrf.mxu0
        %910 = vmatmul.f32.gmra.mxu0 %v326
        %v911 = vpop.f32.mrf.mxu0
        %v912 = vadd.f32 0.0, %v911
        %913 = vmatmul.f32.gmra.mxu0 %v329
        %v914 = vpop.f32.mrf.mxu0
        %v915 = vadd.f32 0.0, %v914
        %916 = vmatmul.f32.gmra.mxu0 %v332
        %v917 = vpop.f32.mrf.mxu0
        %v918 = vadd.f32 0.0, %v917
        %919 = vmatmul.f32.gmra.mxu0 %v335
        %v920 = vpop.f32.mrf.mxu0
        %921 = vmatmul.f32.gmra.mxu0 %v338
        %v922 = vpop.f32.mrf.mxu0
        %v923 = vadd.f32 0.0, %v922
        %924 = vmatmul.f32.gmra.mxu0 %v341
        %v925 = vpop.f32.mrf.mxu0
        %v926 = vadd.f32 0.0, %v925
        %927 = vmatmul.f32.gmra.mxu0 %v344
        %v928 = vpop.f32.mrf.mxu0
        %v929 = vadd.f32 0.0, %v928
        %930 = vmatmul.f32.gmra.mxu0 %v347
        %v931 = vpop.f32.mrf.mxu0
        %932 = vmatmul.f32.gmra.mxu0 %v350
        %v933 = vpop.f32.mrf.mxu0
        %v934 = vadd.f32 0.0, %v933
        %935 = vmatmul.f32.gmra.mxu0 %v353
        %v936 = vpop.f32.mrf.mxu0
        %v937 = vadd.f32 0.0, %v936
        %938 = vmatmul.f32.gmra.mxu0 %v356
        %v939 = vpop.f32.mrf.mxu0
        %v940 = vadd.f32 0.0, %v939
        %941 = vmatmul.f32.gmra.mxu0 %v359
        %v942 = vpop.f32.mrf.mxu0
        %943 = vmatmul.f32.gmra.mxu0 %v362
        %v944 = vpop.f32.mrf.mxu0
        %v945 = vadd.f32 0.0, %v944
        %946 = vmatmul.f32.gmra.mxu0 %v365
        %v947 = vpop.f32.mrf.mxu0
        %v948 = vadd.f32 0.0, %v947
        %949 = vmatmul.f32.gmra.mxu0 %v368
        %v950 = vpop.f32.mrf.mxu0
        %v951 = vadd.f32 0.0, %v950
        %952 = vmatmul.f32.gmra.mxu0 %v371
        %v953 = vpop.f32.mrf.mxu0
        %954 = vmatmul.f32.gmra.mxu0 %v374
        %v955 = vpop.f32.mrf.mxu0
        %v956 = vadd.f32 0.0, %v955
        %957 = vmatmul.f32.gmra.mxu0 %v377
        %v958 = vpop.f32.mrf.mxu0
        %v959 = vadd.f32 0.0, %v958
        %960 = vmatmul.f32.gmra.mxu0 %v380
        %v961 = vpop.f32.mrf.mxu0
        %v962 = vadd.f32 0.0, %v961
        %963 = vmatmul.f32.gmra.mxu0 %v383
        %v964 = vpop.f32.mrf.mxu0
        %965 = vmatmul.f32.gmra.mxu0 %v386
        %v966 = vpop.f32.mrf.mxu0
        %v967 = vadd.f32 0.0, %v966
        %968 = vmatmul.f32.gmra.mxu0 %v389
        %v969 = vpop.f32.mrf.mxu0
        %v970 = vadd.f32 0.0, %v969
        %971 = vmatmul.f32.gmra.mxu0 %v392
        %v972 = vpop.f32.mrf.mxu0
        %v973 = vadd.f32 0.0, %v972
        %974 = vmatmul.f32.gmra.mxu0 %v395
        %v975 = vpop.f32.mrf.mxu0
        %976 = vmatmul.f32.gmra.mxu0 %v398
        %v977 = vpop.f32.mrf.mxu0
        %v978 = vadd.f32 0.0, %v977
        %979 = vmatmul.f32.gmra.mxu0 %v401
        %v980 = vpop.f32.mrf.mxu0
        %v981 = vadd.f32 0.0, %v980
        %982 = vmatmul.f32.gmra.mxu0 %v404
        %v983 = vpop.f32.mrf.mxu0
        %v984 = vadd.f32 0.0, %v983
        %985 = vmatmul.f32.gmra.mxu0 %v407
        %v986 = vpop.f32.mrf.mxu0
        %987 = vmatmul.f32.gmra.mxu0 %v410
        %v988 = vpop.f32.mrf.mxu0
        %v989 = vadd.f32 0.0, %v988
        %990 = vmatmul.f32.gmra.mxu0 %v413
        %v991 = vpop.f32.mrf.mxu0
        %v992 = vadd.f32 0.0, %v991
        %993 = vmatmul.f32.gmra.mxu0 %v416
        %v994 = vpop.f32.mrf.mxu0
        %v995 = vadd.f32 0.0, %v994
        %996 = vmatmul.f32.gmra.mxu0 %v419
        %v997 = vpop.f32.mrf.mxu0
        %998 = vmatmul.f32.gmra.mxu0 %v422
        %v999 = vpop.f32.mrf.mxu0
        %v1000 = vadd.f32 0.0, %v999
        %1001 = vmatmul.f32.gmra.mxu0 %v425
        %v1002 = vpop.f32.mrf.mxu0
        %v1003 = vadd.f32 0.0, %v1002
        %1004 = vmatmul.f32.gmra.mxu0 %v428
        %v1005 = vpop.f32.mrf.mxu0
        %v1006 = vadd.f32 0.0, %v1005
        %1007 = vmatmul.f32.gmra.mxu0 %v431
        %v1008 = vpop.f32.mrf.mxu0
        %1009 = vmatmul.f32.gmra.mxu0 %v434
        %v1010 = vpop.f32.mrf.mxu0
        %v1011 = vadd.f32 0.0, %v1010
        %1012 = vmatmul.f32.gmra.mxu0 %v437
        %v1013 = vpop.f32.mrf.mxu0
        %v1014 = vadd.f32 0.0, %v1013
        %1015 = vmatmul.f32.gmra.mxu0 %v440
        %v1016 = vpop.f32.mrf.mxu0
        %v1017 = vadd.f32 0.0, %v1016
        %1018 = vmatmul.f32.gmra.mxu0 %v443
        %v1019 = vpop.f32.mrf.mxu0
        %1020 = vmatmul.f32.gmra.mxu0 %v446
        %v1021 = vpop.f32.mrf.mxu0
        %v1022 = vadd.f32 0.0, %v1021
        %1023 = vmatmul.f32.gmra.mxu0 %v449
        %v1024 = vpop.f32.mrf.mxu0
        %v1025 = vadd.f32 0.0, %v1024
        %1026 = vmatmul.f32.gmra.mxu0 %v452
        %v1027 = vpop.f32.mrf.mxu0
        %v1028 = vadd.f32 0.0, %v1027
        %1029 = vmatmul.f32.gmra.mxu0 %v455
        %v1030 = vpop.f32.mrf.mxu0
        %1031 = vmatmul.f32.gmra.mxu0 %v458
        %v1032 = vpop.f32.mrf.mxu0
        %v1033 = vadd.f32 0.0, %v1032
        %1034 = vmatmul.f32.gmra.mxu0 %v461
        %v1035 = vpop.f32.mrf.mxu0
        %v1036 = vadd.f32 0.0, %v1035
        %1037 = vmatmul.f32.gmra.mxu0 %v464
        %v1038 = vpop.f32.mrf.mxu0
        %v1039 = vadd.f32 0.0, %v1038
        %1040 = vmatmul.f32.gmra.mxu0 %v467
        %v1041 = vpop.f32.mrf.mxu0
        %1042 = vmatmul.f32.gmra.mxu0 %v470
        %v1043 = vpop.f32.mrf.mxu0
        %v1044 = vadd.f32 0.0, %v1043
        %1045 = vmatmul.f32.gmra.mxu0 %v473
        %v1046 = vpop.f32.mrf.mxu0
        %v1047 = vadd.f32 0.0, %v1046
        %1048 = vmatmul.f32.gmra.mxu0 %v476
        %v1049 = vpop.f32.mrf.mxu0
        %v1050 = vadd.f32 0.0, %v1049
        %1051 = vmatmul.f32.gmra.mxu0 %v479
        %v1052 = vpop.f32.mrf.mxu0
        %1053 = vmatmul.f32.gmra.mxu0 %v482
        %v1054 = vpop.f32.mrf.mxu0
        %v1055 = vadd.f32 0.0, %v1054
        %1056 = vmatmul.f32.gmra.mxu0 %v485
        %v1057 = vpop.f32.mrf.mxu0
        %v1058 = vadd.f32 0.0, %v1057
        %1059 = vmatmul.f32.gmra.mxu0 %v488
        %v1060 = vpop.f32.mrf.mxu0
        %v1061 = vadd.f32 0.0, %v1060
        %1062 = vmatmul.f32.gmra.mxu0 %v491
        %v1063 = vpop.f32.mrf.mxu0
        %1064 = vmatmul.f32.gmra.mxu0 %v494
        %v1065 = vpop.f32.mrf.mxu0
        %v1066 = vadd.f32 0.0, %v1065
        %1067 = vmatmul.f32.gmra.mxu0 %v497
        %v1068 = vpop.f32.mrf.mxu0
        %v1069 = vadd.f32 0.0, %v1068
        %1070 = vmatmul.f32.gmra.mxu0 %v500
        %v1071 = vpop.f32.mrf.mxu0
        %v1072 = vadd.f32 0.0, %v1071
        %1073 = vmatmul.f32.gmra.mxu0 %v503
        %v1074 = vpop.f32.mrf.mxu0
        %1075 = vdwg.mxu0
        %v1077 = vsel %vm505, %v303, 0
        %1079 = vmatpush.msra.mxu0 0.0
        %1080 = vmatpush.msra.mxu0 0.0
        %1081 = vmatpush.msra.mxu0 0.0
        %1082 = vmatpush.msra.mxu0 0.0
        %1083 = vmatpush.msra.mxu0 0.0
        %1084 = vmatpush.msra.mxu0 0.0
        %1085 = vmatpush.msra.mxu0 0.0
        %1086 = vmatpush.msra.mxu0 0.0
        %1087 = vmatpush.msra.mxu0 0.0
        %1088 = vmatpush.msra.mxu0 0.0
        %1089 = vmatpush.msra.mxu0 0.0
        %1090 = vmatpush.msra.mxu0 0.0
        %1091 = vmatpush.msra.mxu0 0.0
        %1092 = vmatpush.msra.mxu0 0.0
        %1093 = vmatpush.msra.mxu0 0.0
        %1094 = vmatpush.msra.mxu0 %v1077
        %1095 = vmatmul.f32.gmra.mxu0 %v687
        %v1096 = vpop.f32.mrf.mxu0
        %v1097 = vadd.f32 %v901, %v1096
        %1098 = vmatmul.f32.gmra.mxu0 %v690
        %v1099 = vpop.f32.mrf.mxu0
        %v1100 = vadd.f32 %v904, %v1099
        %1101 = vmatmul.f32.gmra.mxu0 %v693
        %v1102 = vpop.f32.mrf.mxu0
        %v1103 = vadd.f32 %v907, %v1102
        %1104 = vmatmul.f32.gmra.mxu0 %v696
        %v1105 = vpop.f32.mrf.mxu0
        %1106 = vmatmul.f32.gmra.mxu0 %v314
        %v1107 = vpop.f32.mrf.mxu0
        %v1108 = vadd.f32 %v912, %v1107
        %1109 = vmatmul.f32.gmra.mxu0 %v317
        %v1110 = vpop.f32.mrf.mxu0
        %v1111 = vadd.f32 %v915, %v1110
        %1112 = vmatmul.f32.gmra.mxu0 %v320
        %v1113 = vpop.f32.mrf.mxu0
        %v1114 = vadd.f32 %v918, %v1113
        %1115 = vmatmul.f32.gmra.mxu0 %v323
        %v1116 = vpop.f32.mrf.mxu0
        %1117 = vmatmul.f32.gmra.mxu0 %v326
        %v1118 = vpop.f32.mrf.mxu0
        %v1119 = vadd.f32 %v923, %v1118
        %1120 = vmatmul.f32.gmra.mxu0 %v329
        %v1121 = vpop.f32.mrf.mxu0
        %v1122 = vadd.f32 %v926, %v1121
        %1123 = vmatmul.f32.gmra.mxu0 %v332
        %v1124 = vpop.f32.mrf.mxu0
        %v1125 = vadd.f32 %v929, %v1124
        %1126 = vmatmul.f32.gmra.mxu0 %v335
        %v1127 = vpop.f32.mrf.mxu0
        %1128 = vmatmul.f32.gmra.mxu0 %v338
        %v1129 = vpop.f32.mrf.mxu0
        %v1130 = vadd.f32 %v934, %v1129
        %1131 = vmatmul.f32.gmra.mxu0 %v341
        %v1132 = vpop.f32.mrf.mxu0
        %v1133 = vadd.f32 %v937, %v1132
        %1134 = vmatmul.f32.gmra.mxu0 %v344
        %v1135 = vpop.f32.mrf.mxu0
        %v1136 = vadd.f32 %v940, %v1135
        %1137 = vmatmul.f32.gmra.mxu0 %v347
        %v1138 = vpop.f32.mrf.mxu0
        %1139 = vmatmul.f32.gmra.mxu0 %v350
        %v1140 = vpop.f32.mrf.mxu0
        %v1141 = vadd.f32 %v945, %v1140
        %1142 = vmatmul.f32.gmra.mxu0 %v353
        %v1143 = vpop.f32.mrf.mxu0
        %v1144 = vadd.f32 %v948, %v1143
        %1145 = vmatmul.f32.gmra.mxu0 %v356
        %v1146 = vpop.f32.mrf.mxu0
        %v1147 = vadd.f32 %v951, %v1146
        %1148 = vmatmul.f32.gmra.mxu0 %v359
        %v1149 = vpop.f32.mrf.mxu0
        %1150 = vmatmul.f32.gmra.mxu0 %v362
        %v1151 = vpop.f32.mrf.mxu0
        %v1152 = vadd.f32 %v956, %v1151
        %1153 = vmatmul.f32.gmra.mxu0 %v365
        %v1154 = vpop.f32.mrf.mxu0
        %v1155 = vadd.f32 %v959, %v1154
        %1156 = vmatmul.f32.gmra.mxu0 %v368
        %v1157 = vpop.f32.mrf.mxu0
        %v1158 = vadd.f32 %v962, %v1157
        %1159 = vmatmul.f32.gmra.mxu0 %v371
        %v1160 = vpop.f32.mrf.mxu0
        %1161 = vmatmul.f32.gmra.mxu0 %v374
        %v1162 = vpop.f32.mrf.mxu0
        %v1163 = vadd.f32 %v967, %v1162
        %1164 = vmatmul.f32.gmra.mxu0 %v377
        %v1165 = vpop.f32.mrf.mxu0
        %v1166 = vadd.f32 %v970, %v1165
        %1167 = vmatmul.f32.gmra.mxu0 %v380
        %v1168 = vpop.f32.mrf.mxu0
        %v1169 = vadd.f32 %v973, %v1168
        %1170 = vmatmul.f32.gmra.mxu0 %v383
        %v1171 = vpop.f32.mrf.mxu0
        %1172 = vmatmul.f32.gmra.mxu0 %v386
        %v1173 = vpop.f32.mrf.mxu0
        %v1174 = vadd.f32 %v978, %v1173
        %1175 = vmatmul.f32.gmra.mxu0 %v389
        %v1176 = vpop.f32.mrf.mxu0
        %v1177 = vadd.f32 %v981, %v1176
        %1178 = vmatmul.f32.gmra.mxu0 %v392
        %v1179 = vpop.f32.mrf.mxu0
        %v1180 = vadd.f32 %v984, %v1179
        %1181 = vmatmul.f32.gmra.mxu0 %v395
        %v1182 = vpop.f32.mrf.mxu0
        %1183 = vmatmul.f32.gmra.mxu0 %v398
        %v1184 = vpop.f32.mrf.mxu0
        %v1185 = vadd.f32 %v989, %v1184
        %1186 = vmatmul.f32.gmra.mxu0 %v401
        %v1187 = vpop.f32.mrf.mxu0
        %v1188 = vadd.f32 %v992, %v1187
        %1189 = vmatmul.f32.gmra.mxu0 %v404
        %v1190 = vpop.f32.mrf.mxu0
        %v1191 = vadd.f32 %v995, %v1190
        %1192 = vmatmul.f32.gmra.mxu0 %v407
        %v1193 = vpop.f32.mrf.mxu0
        %1194 = vmatmul.f32.gmra.mxu0 %v410
        %v1195 = vpop.f32.mrf.mxu0
        %v1196 = vadd.f32 %v1000, %v1195
        %1197 = vmatmul.f32.gmra.mxu0 %v413
        %v1198 = vpop.f32.mrf.mxu0
        %v1199 = vadd.f32 %v1003, %v1198
        %1200 = vmatmul.f32.gmra.mxu0 %v416
        %v1201 = vpop.f32.mrf.mxu0
        %v1202 = vadd.f32 %v1006, %v1201
        %1203 = vmatmul.f32.gmra.mxu0 %v419
        %v1204 = vpop.f32.mrf.mxu0
        %1205 = vmatmul.f32.gmra.mxu0 %v422
        %v1206 = vpop.f32.mrf.mxu0
        %v1207 = vadd.f32 %v1011, %v1206
        %1208 = vmatmul.f32.gmra.mxu0 %v425
        %v1209 = vpop.f32.mrf.mxu0
        %v1210 = vadd.f32 %v1014, %v1209
        %1211 = vmatmul.f32.gmra.mxu0 %v428
        %v1212 = vpop.f32.mrf.mxu0
        %v1213 = vadd.f32 %v1017, %v1212
        %1214 = vmatmul.f32.gmra.mxu0 %v431
        %v1215 = vpop.f32.mrf.mxu0
        %1216 = vmatmul.f32.gmra.mxu0 %v434
        %v1217 = vpop.f32.mrf.mxu0
        %v1218 = vadd.f32 %v1022, %v1217
        %1219 = vmatmul.f32.gmra.mxu0 %v437
        %v1220 = vpop.f32.mrf.mxu0
        %v1221 = vadd.f32 %v1025, %v1220
        %1222 = vmatmul.f32.gmra.mxu0 %v440
        %v1223 = vpop.f32.mrf.mxu0
        %v1224 = vadd.f32 %v1028, %v1223
        %1225 = vmatmul.f32.gmra.mxu0 %v443
        %v1226 = vpop.f32.mrf.mxu0
        %1227 = vmatmul.f32.gmra.mxu0 %v446
        %v1228 = vpop.f32.mrf.mxu0
        %v1229 = vadd.f32 %v1033, %v1228
        %1230 = vmatmul.f32.gmra.mxu0 %v449
        %v1231 = vpop.f32.mrf.mxu0
        %v1232 = vadd.f32 %v1036, %v1231
        %1233 = vmatmul.f32.gmra.mxu0 %v452
        %v1234 = vpop.f32.mrf.mxu0
        %v1235 = vadd.f32 %v1039, %v1234
        %1236 = vmatmul.f32.gmra.mxu0 %v455
        %v1237 = vpop.f32.mrf.mxu0
        %1238 = vmatmul.f32.gmra.mxu0 %v458
        %v1239 = vpop.f32.mrf.mxu0
        %v1240 = vadd.f32 %v1044, %v1239
        %1241 = vmatmul.f32.gmra.mxu0 %v461
        %v1242 = vpop.f32.mrf.mxu0
        %v1243 = vadd.f32 %v1047, %v1242
        %1244 = vmatmul.f32.gmra.mxu0 %v464
        %v1245 = vpop.f32.mrf.mxu0
        %v1246 = vadd.f32 %v1050, %v1245
        %1247 = vmatmul.f32.gmra.mxu0 %v467
        %v1248 = vpop.f32.mrf.mxu0
        %1249 = vmatmul.f32.gmra.mxu0 %v470
        %v1250 = vpop.f32.mrf.mxu0
        %v1251 = vadd.f32 %v1055, %v1250
        %1252 = vmatmul.f32.gmra.mxu0 %v473
        %v1253 = vpop.f32.mrf.mxu0
        %v1254 = vadd.f32 %v1058, %v1253
        %1255 = vmatmul.f32.gmra.mxu0 %v476
        %v1256 = vpop.f32.mrf.mxu0
        %v1257 = vadd.f32 %v1061, %v1256
        %1258 = vmatmul.f32.gmra.mxu0 %v479
        %v1259 = vpop.f32.mrf.mxu0
        %1260 = vmatmul.f32.gmra.mxu0 %v482
        %v1261 = vpop.f32.mrf.mxu0
        %v1262 = vadd.f32 %v1066, %v1261
        %1263 = vmatmul.f32.gmra.mxu0 %v485
        %v1264 = vpop.f32.mrf.mxu0
        %v1265 = vadd.f32 %v1069, %v1264
        %1266 = vmatmul.f32.gmra.mxu0 %v488
        %v1267 = vpop.f32.mrf.mxu0
        %v1268 = vadd.f32 %v1072, %v1267
        %1269 = vmatmul.f32.gmra.mxu0 %v491
        %v1270 = vpop.f32.mrf.mxu0
        %1271 = vdwg.mxu0
        %s1272 = scalar_lea.vmem %s233, 20
        %v1273 = vld [vmem:[%s1272] sm:$0xf]
        %v1275 = vsel %vm505, %v1273, 0
        %1277 = vmatpush.msra.mxu0 0.0
        %1278 = vmatpush.msra.mxu0 0.0
        %1279 = vmatpush.msra.mxu0 0.0
        %1280 = vmatpush.msra.mxu0 0.0
        %1281 = vmatpush.msra.mxu0 0.0
        %1282 = vmatpush.msra.mxu0 0.0
        %1283 = vmatpush.msra.mxu0 0.0
        %1284 = vmatpush.msra.mxu0 0.0
        %1285 = vmatpush.msra.mxu0 0.0
        %1286 = vmatpush.msra.mxu0 0.0
        %1287 = vmatpush.msra.mxu0 0.0
        %1288 = vmatpush.msra.mxu0 0.0
        %1289 = vmatpush.msra.mxu0 0.0
        %1290 = vmatpush.msra.mxu0 0.0
        %1291 = vmatpush.msra.mxu0 0.0
        %1292 = vmatpush.msra.mxu0 %v1275
        %1293 = vmatmul.f32.gmra.mxu0 %v314
        %v1294 = vpop.f32.mrf.mxu0
        %v1295 = vadd.f32 0.0, %v1294
        %1296 = vmatmul.f32.gmra.mxu0 %v317
        %v1297 = vpop.f32.mrf.mxu0
        %v1298 = vadd.f32 0.0, %v1297
        %1299 = vmatmul.f32.gmra.mxu0 %v320
        %v1300 = vpop.f32.mrf.mxu0
        %v1301 = vadd.f32 0.0, %v1300
        %1302 = vmatmul.f32.gmra.mxu0 %v323
        %v1303 = vpop.f32.mrf.mxu0
        %1304 = vmatmul.f32.gmra.mxu0 %v326
        %v1305 = vpop.f32.mrf.mxu0
        %v1306 = vadd.f32 0.0, %v1305
        %1307 = vmatmul.f32.gmra.mxu0 %v329
        %v1308 = vpop.f32.mrf.mxu0
        %v1309 = vadd.f32 0.0, %v1308
        %1310 = vmatmul.f32.gmra.mxu0 %v332
        %v1311 = vpop.f32.mrf.mxu0
        %v1312 = vadd.f32 0.0, %v1311
        %1313 = vmatmul.f32.gmra.mxu0 %v335
        %v1314 = vpop.f32.mrf.mxu0
        %1315 = vmatmul.f32.gmra.mxu0 %v338
        %v1316 = vpop.f32.mrf.mxu0
        %v1317 = vadd.f32 0.0, %v1316
        %1318 = vmatmul.f32.gmra.mxu0 %v341
        %v1319 = vpop.f32.mrf.mxu0
        %v1320 = vadd.f32 0.0, %v1319
        %1321 = vmatmul.f32.gmra.mxu0 %v344
        %v1322 = vpop.f32.mrf.mxu0
        %v1323 = vadd.f32 0.0, %v1322
        %1324 = vmatmul.f32.gmra.mxu0 %v347
        %v1325 = vpop.f32.mrf.mxu0
        %1326 = vmatmul.f32.gmra.mxu0 %v350
        %v1327 = vpop.f32.mrf.mxu0
        %v1328 = vadd.f32 0.0, %v1327
        %1329 = vmatmul.f32.gmra.mxu0 %v353
        %v1330 = vpop.f32.mrf.mxu0
        %v1331 = vadd.f32 0.0, %v1330
        %1332 = vmatmul.f32.gmra.mxu0 %v356
        %v1333 = vpop.f32.mrf.mxu0
        %v1334 = vadd.f32 0.0, %v1333
        %1335 = vmatmul.f32.gmra.mxu0 %v359
        %v1336 = vpop.f32.mrf.mxu0
        %1337 = vmatmul.f32.gmra.mxu0 %v362
        %v1338 = vpop.f32.mrf.mxu0
        %v1339 = vadd.f32 0.0, %v1338
        %1340 = vmatmul.f32.gmra.mxu0 %v365
        %v1341 = vpop.f32.mrf.mxu0
        %v1342 = vadd.f32 0.0, %v1341
        %1343 = vmatmul.f32.gmra.mxu0 %v368
        %v1344 = vpop.f32.mrf.mxu0
        %v1345 = vadd.f32 0.0, %v1344
        %1346 = vmatmul.f32.gmra.mxu0 %v371
        %v1347 = vpop.f32.mrf.mxu0
        %1348 = vmatmul.f32.gmra.mxu0 %v374
        %v1349 = vpop.f32.mrf.mxu0
        %v1350 = vadd.f32 0.0, %v1349
        %1351 = vmatmul.f32.gmra.mxu0 %v377
        %v1352 = vpop.f32.mrf.mxu0
        %v1353 = vadd.f32 0.0, %v1352
        %1354 = vmatmul.f32.gmra.mxu0 %v380
        %v1355 = vpop.f32.mrf.mxu0
        %v1356 = vadd.f32 0.0, %v1355
        %1357 = vmatmul.f32.gmra.mxu0 %v383
        %v1358 = vpop.f32.mrf.mxu0
        %1359 = vmatmul.f32.gmra.mxu0 %v386
        %v1360 = vpop.f32.mrf.mxu0
        %v1361 = vadd.f32 0.0, %v1360
        %1362 = vmatmul.f32.gmra.mxu0 %v389
        %v1363 = vpop.f32.mrf.mxu0
        %v1364 = vadd.f32 0.0, %v1363
        %1365 = vmatmul.f32.gmra.mxu0 %v392
        %v1366 = vpop.f32.mrf.mxu0
        %v1367 = vadd.f32 0.0, %v1366
        %1368 = vmatmul.f32.gmra.mxu0 %v395
        %v1369 = vpop.f32.mrf.mxu0
        %1370 = vmatmul.f32.gmra.mxu0 %v398
        %v1371 = vpop.f32.mrf.mxu0
        %v1372 = vadd.f32 0.0, %v1371
        %1373 = vmatmul.f32.gmra.mxu0 %v401
        %v1374 = vpop.f32.mrf.mxu0
        %v1375 = vadd.f32 0.0, %v1374
        %1376 = vmatmul.f32.gmra.mxu0 %v404
        %v1377 = vpop.f32.mrf.mxu0
        %v1378 = vadd.f32 0.0, %v1377
        %1379 = vmatmul.f32.gmra.mxu0 %v407
        %v1380 = vpop.f32.mrf.mxu0
        %1381 = vmatmul.f32.gmra.mxu0 %v410
        %v1382 = vpop.f32.mrf.mxu0
        %v1383 = vadd.f32 0.0, %v1382
        %1384 = vmatmul.f32.gmra.mxu0 %v413
        %v1385 = vpop.f32.mrf.mxu0
        %v1386 = vadd.f32 0.0, %v1385
        %1387 = vmatmul.f32.gmra.mxu0 %v416
        %v1388 = vpop.f32.mrf.mxu0
        %v1389 = vadd.f32 0.0, %v1388
        %1390 = vmatmul.f32.gmra.mxu0 %v419
        %v1391 = vpop.f32.mrf.mxu0
        %1392 = vmatmul.f32.gmra.mxu0 %v422
        %v1393 = vpop.f32.mrf.mxu0
        %v1394 = vadd.f32 0.0, %v1393
        %1395 = vmatmul.f32.gmra.mxu0 %v425
        %v1396 = vpop.f32.mrf.mxu0
        %v1397 = vadd.f32 0.0, %v1396
        %1398 = vmatmul.f32.gmra.mxu0 %v428
        %v1399 = vpop.f32.mrf.mxu0
        %v1400 = vadd.f32 0.0, %v1399
        %1401 = vmatmul.f32.gmra.mxu0 %v431
        %v1402 = vpop.f32.mrf.mxu0
        %1403 = vmatmul.f32.gmra.mxu0 %v434
        %v1404 = vpop.f32.mrf.mxu0
        %v1405 = vadd.f32 0.0, %v1404
        %1406 = vmatmul.f32.gmra.mxu0 %v437
        %v1407 = vpop.f32.mrf.mxu0
        %v1408 = vadd.f32 0.0, %v1407
        %1409 = vmatmul.f32.gmra.mxu0 %v440
        %v1410 = vpop.f32.mrf.mxu0
        %v1411 = vadd.f32 0.0, %v1410
        %1412 = vmatmul.f32.gmra.mxu0 %v443
        %v1413 = vpop.f32.mrf.mxu0
        %1414 = vmatmul.f32.gmra.mxu0 %v446
        %v1415 = vpop.f32.mrf.mxu0
        %v1416 = vadd.f32 0.0, %v1415
        %1417 = vmatmul.f32.gmra.mxu0 %v449
        %v1418 = vpop.f32.mrf.mxu0
        %v1419 = vadd.f32 0.0, %v1418
        %1420 = vmatmul.f32.gmra.mxu0 %v452
        %v1421 = vpop.f32.mrf.mxu0
        %v1422 = vadd.f32 0.0, %v1421
        %1423 = vmatmul.f32.gmra.mxu0 %v455
        %v1424 = vpop.f32.mrf.mxu0
        %1425 = vmatmul.f32.gmra.mxu0 %v458
        %v1426 = vpop.f32.mrf.mxu0
        %v1427 = vadd.f32 0.0, %v1426
        %1428 = vmatmul.f32.gmra.mxu0 %v461
        %v1429 = vpop.f32.mrf.mxu0
        %v1430 = vadd.f32 0.0, %v1429
        %1431 = vmatmul.f32.gmra.mxu0 %v464
        %v1432 = vpop.f32.mrf.mxu0
        %v1433 = vadd.f32 0.0, %v1432
        %1434 = vmatmul.f32.gmra.mxu0 %v467
        %v1435 = vpop.f32.mrf.mxu0
        %1436 = vmatmul.f32.gmra.mxu0 %v470
        %v1437 = vpop.f32.mrf.mxu0
        %v1438 = vadd.f32 0.0, %v1437
        %1439 = vmatmul.f32.gmra.mxu0 %v473
        %v1440 = vpop.f32.mrf.mxu0
        %v1441 = vadd.f32 0.0, %v1440
        %1442 = vmatmul.f32.gmra.mxu0 %v476
        %v1443 = vpop.f32.mrf.mxu0
        %v1444 = vadd.f32 0.0, %v1443
        %1445 = vmatmul.f32.gmra.mxu0 %v479
        %v1446 = vpop.f32.mrf.mxu0
        %1447 = vmatmul.f32.gmra.mxu0 %v482
        %v1448 = vpop.f32.mrf.mxu0
        %v1449 = vadd.f32 0.0, %v1448
        %1450 = vmatmul.f32.gmra.mxu0 %v485
        %v1451 = vpop.f32.mrf.mxu0
        %v1452 = vadd.f32 0.0, %v1451
        %1453 = vmatmul.f32.gmra.mxu0 %v488
        %v1454 = vpop.f32.mrf.mxu0
        %v1455 = vadd.f32 0.0, %v1454
        %1456 = vmatmul.f32.gmra.mxu0 %v491
        %v1457 = vpop.f32.mrf.mxu0
        %1458 = vmatmul.f32.gmra.mxu0 %v494
        %v1459 = vpop.f32.mrf.mxu0
        %v1460 = vadd.f32 0.0, %v1459
        %1461 = vmatmul.f32.gmra.mxu0 %v497
        %v1462 = vpop.f32.mrf.mxu0
        %v1463 = vadd.f32 0.0, %v1462
        %1464 = vmatmul.f32.gmra.mxu0 %v500
        %v1465 = vpop.f32.mrf.mxu0
        %v1466 = vadd.f32 0.0, %v1465
        %1467 = vmatmul.f32.gmra.mxu0 %v503
        %v1468 = vpop.f32.mrf.mxu0
        %1469 = vdwg.mxu0
        %v1471 = vsel %vm505, %v305, 0
        %1473 = vmatpush.msra.mxu0 0.0
        %1474 = vmatpush.msra.mxu0 0.0
        %1475 = vmatpush.msra.mxu0 0.0
        %1476 = vmatpush.msra.mxu0 0.0
        %1477 = vmatpush.msra.mxu0 0.0
        %1478 = vmatpush.msra.mxu0 0.0
        %1479 = vmatpush.msra.mxu0 0.0
        %1480 = vmatpush.msra.mxu0 0.0
        %1481 = vmatpush.msra.mxu0 0.0
        %1482 = vmatpush.msra.mxu0 0.0
        %1483 = vmatpush.msra.mxu0 0.0
        %1484 = vmatpush.msra.mxu0 0.0
        %1485 = vmatpush.msra.mxu0 0.0
        %1486 = vmatpush.msra.mxu0 0.0
        %1487 = vmatpush.msra.mxu0 0.0
        %1488 = vmatpush.msra.mxu0 %v1471
        %1489 = vmatmul.f32.gmra.mxu0 %v687
        %v1490 = vpop.f32.mrf.mxu0
        %v1491 = vadd.f32 %v1295, %v1490
        %1492 = vmatmul.f32.gmra.mxu0 %v690
        %v1493 = vpop.f32.mrf.mxu0
        %v1494 = vadd.f32 %v1298, %v1493
        %1495 = vmatmul.f32.gmra.mxu0 %v693
        %v1496 = vpop.f32.mrf.mxu0
        %v1497 = vadd.f32 %v1301, %v1496
        %1498 = vmatmul.f32.gmra.mxu0 %v696
        %v1499 = vpop.f32.mrf.mxu0
        %1500 = vmatmul.f32.gmra.mxu0 %v314
        %v1501 = vpop.f32.mrf.mxu0
        %v1502 = vadd.f32 %v1306, %v1501
        %1503 = vmatmul.f32.gmra.mxu0 %v317
        %v1504 = vpop.f32.mrf.mxu0
        %v1505 = vadd.f32 %v1309, %v1504
        %1506 = vmatmul.f32.gmra.mxu0 %v320
        %v1507 = vpop.f32.mrf.mxu0
        %v1508 = vadd.f32 %v1312, %v1507
        %1509 = vmatmul.f32.gmra.mxu0 %v323
        %v1510 = vpop.f32.mrf.mxu0
        %1511 = vmatmul.f32.gmra.mxu0 %v326
        %v1512 = vpop.f32.mrf.mxu0
        %v1513 = vadd.f32 %v1317, %v1512
        %1514 = vmatmul.f32.gmra.mxu0 %v329
        %v1515 = vpop.f32.mrf.mxu0
        %v1516 = vadd.f32 %v1320, %v1515
        %1517 = vmatmul.f32.gmra.mxu0 %v332
        %v1518 = vpop.f32.mrf.mxu0
        %v1519 = vadd.f32 %v1323, %v1518
        %1520 = vmatmul.f32.gmra.mxu0 %v335
        %v1521 = vpop.f32.mrf.mxu0
        %1522 = vmatmul.f32.gmra.mxu0 %v338
        %v1523 = vpop.f32.mrf.mxu0
        %v1524 = vadd.f32 %v1328, %v1523
        %1525 = vmatmul.f32.gmra.mxu0 %v341
        %v1526 = vpop.f32.mrf.mxu0
        %v1527 = vadd.f32 %v1331, %v1526
        %1528 = vmatmul.f32.gmra.mxu0 %v344
        %v1529 = vpop.f32.mrf.mxu0
        %v1530 = vadd.f32 %v1334, %v1529
        %1531 = vmatmul.f32.gmra.mxu0 %v347
        %v1532 = vpop.f32.mrf.mxu0
        %1533 = vmatmul.f32.gmra.mxu0 %v350
        %v1534 = vpop.f32.mrf.mxu0
        %v1535 = vadd.f32 %v1339, %v1534
        %1536 = vmatmul.f32.gmra.mxu0 %v353
        %v1537 = vpop.f32.mrf.mxu0
        %v1538 = vadd.f32 %v1342, %v1537
        %1539 = vmatmul.f32.gmra.mxu0 %v356
        %v1540 = vpop.f32.mrf.mxu0
        %v1541 = vadd.f32 %v1345, %v1540
        %1542 = vmatmul.f32.gmra.mxu0 %v359
        %v1543 = vpop.f32.mrf.mxu0
        %1544 = vmatmul.f32.gmra.mxu0 %v362
        %v1545 = vpop.f32.mrf.mxu0
        %v1546 = vadd.f32 %v1350, %v1545
        %1547 = vmatmul.f32.gmra.mxu0 %v365
        %v1548 = vpop.f32.mrf.mxu0
        %v1549 = vadd.f32 %v1353, %v1548
        %1550 = vmatmul.f32.gmra.mxu0 %v368
        %v1551 = vpop.f32.mrf.mxu0
        %v1552 = vadd.f32 %v1356, %v1551
        %1553 = vmatmul.f32.gmra.mxu0 %v371
        %v1554 = vpop.f32.mrf.mxu0
        %1555 = vmatmul.f32.gmra.mxu0 %v374
        %v1556 = vpop.f32.mrf.mxu0
        %v1557 = vadd.f32 %v1361, %v1556
        %1558 = vmatmul.f32.gmra.mxu0 %v377
        %v1559 = vpop.f32.mrf.mxu0
        %v1560 = vadd.f32 %v1364, %v1559
        %1561 = vmatmul.f32.gmra.mxu0 %v380
        %v1562 = vpop.f32.mrf.mxu0
        %v1563 = vadd.f32 %v1367, %v1562
        %1564 = vmatmul.f32.gmra.mxu0 %v383
        %v1565 = vpop.f32.mrf.mxu0
        %1566 = vmatmul.f32.gmra.mxu0 %v386
        %v1567 = vpop.f32.mrf.mxu0
        %v1568 = vadd.f32 %v1372, %v1567
        %1569 = vmatmul.f32.gmra.mxu0 %v389
        %v1570 = vpop.f32.mrf.mxu0
        %v1571 = vadd.f32 %v1375, %v1570
        %1572 = vmatmul.f32.gmra.mxu0 %v392
        %v1573 = vpop.f32.mrf.mxu0
        %v1574 = vadd.f32 %v1378, %v1573
        %1575 = vmatmul.f32.gmra.mxu0 %v395
        %v1576 = vpop.f32.mrf.mxu0
        %1577 = vmatmul.f32.gmra.mxu0 %v398
        %v1578 = vpop.f32.mrf.mxu0
        %v1579 = vadd.f32 %v1383, %v1578
        %1580 = vmatmul.f32.gmra.mxu0 %v401
        %v1581 = vpop.f32.mrf.mxu0
        %v1582 = vadd.f32 %v1386, %v1581
        %1583 = vmatmul.f32.gmra.mxu0 %v404
        %v1584 = vpop.f32.mrf.mxu0
        %v1585 = vadd.f32 %v1389, %v1584
        %1586 = vmatmul.f32.gmra.mxu0 %v407
        %v1587 = vpop.f32.mrf.mxu0
        %1588 = vmatmul.f32.gmra.mxu0 %v410
        %v1589 = vpop.f32.mrf.mxu0
        %v1590 = vadd.f32 %v1394, %v1589
        %1591 = vmatmul.f32.gmra.mxu0 %v413
        %v1592 = vpop.f32.mrf.mxu0
        %v1593 = vadd.f32 %v1397, %v1592
        %1594 = vmatmul.f32.gmra.mxu0 %v416
        %v1595 = vpop.f32.mrf.mxu0
        %v1596 = vadd.f32 %v1400, %v1595
        %1597 = vmatmul.f32.gmra.mxu0 %v419
        %v1598 = vpop.f32.mrf.mxu0
        %1599 = vmatmul.f32.gmra.mxu0 %v422
        %v1600 = vpop.f32.mrf.mxu0
        %v1601 = vadd.f32 %v1405, %v1600
        %1602 = vmatmul.f32.gmra.mxu0 %v425
        %v1603 = vpop.f32.mrf.mxu0
        %v1604 = vadd.f32 %v1408, %v1603
        %1605 = vmatmul.f32.gmra.mxu0 %v428
        %v1606 = vpop.f32.mrf.mxu0
        %v1607 = vadd.f32 %v1411, %v1606
        %1608 = vmatmul.f32.gmra.mxu0 %v431
        %v1609 = vpop.f32.mrf.mxu0
        %1610 = vmatmul.f32.gmra.mxu0 %v434
        %v1611 = vpop.f32.mrf.mxu0
        %v1612 = vadd.f32 %v1416, %v1611
        %1613 = vmatmul.f32.gmra.mxu0 %v437
        %v1614 = vpop.f32.mrf.mxu0
        %v1615 = vadd.f32 %v1419, %v1614
        %1616 = vmatmul.f32.gmra.mxu0 %v440
        %v1617 = vpop.f32.mrf.mxu0
        %v1618 = vadd.f32 %v1422, %v1617
        %1619 = vmatmul.f32.gmra.mxu0 %v443
        %v1620 = vpop.f32.mrf.mxu0
        %1621 = vmatmul.f32.gmra.mxu0 %v446
        %v1622 = vpop.f32.mrf.mxu0
        %v1623 = vadd.f32 %v1427, %v1622
        %1624 = vmatmul.f32.gmra.mxu0 %v449
        %v1625 = vpop.f32.mrf.mxu0
        %v1626 = vadd.f32 %v1430, %v1625
        %1627 = vmatmul.f32.gmra.mxu0 %v452
        %v1628 = vpop.f32.mrf.mxu0
        %v1629 = vadd.f32 %v1433, %v1628
        %1630 = vmatmul.f32.gmra.mxu0 %v455
        %v1631 = vpop.f32.mrf.mxu0
        %1632 = vmatmul.f32.gmra.mxu0 %v458
        %v1633 = vpop.f32.mrf.mxu0
        %v1634 = vadd.f32 %v1438, %v1633
        %1635 = vmatmul.f32.gmra.mxu0 %v461
        %v1636 = vpop.f32.mrf.mxu0
        %v1637 = vadd.f32 %v1441, %v1636
        %1638 = vmatmul.f32.gmra.mxu0 %v464
        %v1639 = vpop.f32.mrf.mxu0
        %v1640 = vadd.f32 %v1444, %v1639
        %1641 = vmatmul.f32.gmra.mxu0 %v467
        %v1642 = vpop.f32.mrf.mxu0
        %1643 = vmatmul.f32.gmra.mxu0 %v470
        %v1644 = vpop.f32.mrf.mxu0
        %v1645 = vadd.f32 %v1449, %v1644
        %1646 = vmatmul.f32.gmra.mxu0 %v473
        %v1647 = vpop.f32.mrf.mxu0
        %v1648 = vadd.f32 %v1452, %v1647
        %1649 = vmatmul.f32.gmra.mxu0 %v476
        %v1650 = vpop.f32.mrf.mxu0
        %v1651 = vadd.f32 %v1455, %v1650
        %1652 = vmatmul.f32.gmra.mxu0 %v479
        %v1653 = vpop.f32.mrf.mxu0
        %1654 = vmatmul.f32.gmra.mxu0 %v482
        %v1655 = vpop.f32.mrf.mxu0
        %v1656 = vadd.f32 %v1460, %v1655
        %1657 = vmatmul.f32.gmra.mxu0 %v485
        %v1658 = vpop.f32.mrf.mxu0
        %v1659 = vadd.f32 %v1463, %v1658
        %1660 = vmatmul.f32.gmra.mxu0 %v488
        %v1661 = vpop.f32.mrf.mxu0
        %v1662 = vadd.f32 %v1466, %v1661
        %1663 = vmatmul.f32.gmra.mxu0 %v491
        %v1664 = vpop.f32.mrf.mxu0
        %1665 = vdwg.mxu0
        %v1666 = vld [vmem:[%s229 + $0x40] sm:$0xff]
        %v1667 = vld [vmem:[%s229 + $0x48] sm:$0xff]
        %v1668 = vld [vmem:[%s229 + $0x50] sm:$0xff]
        %v1669 = vld [vmem:[%s229 + $0x58] sm:$0xff]
        %v1670 = vld [vmem:[%s229 + $0x60] sm:$0xff]
        %v1671 = vld [vmem:[%s229 + $0x68] sm:$0xff]
        %v1672 = vld [vmem:[%s229 + $0x70] sm:$0xff]
        %v1673 = vld [vmem:[%s229 + $0x78] sm:$0xff]
        %v1674 = vld [vmem:[%s229 + $0x80] sm:$0xff]
        %v1675 = vld [vmem:[%s229 + $0x88] sm:$0xff]
        %v1676 = vld [vmem:[%s229 + $0x90] sm:$0xff]
        %v1677 = vld [vmem:[%s229 + $0x98] sm:$0xff]
        %v1678 = vld [vmem:[%s229 + $0xa0] sm:$0xff]
        %v1679 = vld [vmem:[%s229 + $0xa8] sm:$0xff]
        %v1680 = vld [vmem:[%s229 + $0xb0] sm:$0xff]
        %v1681 = vld [vmem:[%s229 + $0xb8] sm:$0xff]
        %v1682 = vld [vmem:[%s229 + $0xc0] sm:$0xff]
        %v1683 = vld [vmem:[%s229 + $0xc8] sm:$0xff]
        %v1684 = vld [vmem:[%s229 + $0xd0] sm:$0xff]
        %v1685 = vld [vmem:[%s229 + $0xd8] sm:$0xff]
        %v1686 = vld [vmem:[%s229 + $0xe0] sm:$0xff]
        %v1687 = vld [vmem:[%s229 + $0xe8] sm:$0xff]
        %v1688 = vld [vmem:[%s229 + $0xf0] sm:$0xff]
        %v1689 = vld [vmem:[%s229 + $0xf8] sm:$0xff]
        %v1690 = vld [vmem:[%s229 + $0x100] sm:$0xff]
        %v1691 = vld [vmem:[%s229 + $0x108] sm:$0xff]
        %v1692 = vld [vmem:[%s229 + $0x110] sm:$0xff]
        %v1693 = vld [vmem:[%s229 + $0x118] sm:$0xff]
        %v1694 = vld [vmem:[%s229 + $0x120] sm:$0xff]
        %v1695 = vld [vmem:[%s229 + $0x128] sm:$0xff]
        %v1696 = vld [vmem:[%s229 + $0x130] sm:$0xff]
        %v1697 = vld [vmem:[%s229 + $0x138] sm:$0xff]
        %v1698 = vld [vmem:[%s229 + $0x140] sm:$0xff]
        %v1699 = vld [vmem:[%s229 + $0x148] sm:$0xff]
        %v1700 = vld [vmem:[%s229 + $0x150] sm:$0xff]
        %v1701 = vld [vmem:[%s229 + $0x158] sm:$0xff]
        %v1702 = vld [vmem:[%s229 + $0x160] sm:$0xff]
        %v1703 = vld [vmem:[%s229 + $0x168] sm:$0xff]
        %v1704 = vld [vmem:[%s229 + $0x170] sm:$0xff]
        %v1705 = vld [vmem:[%s229 + $0x178] sm:$0xff]
        %v1706 = vld [vmem:[%s229 + $0x180] sm:$0xff]
        %v1707 = vld [vmem:[%s229 + $0x188] sm:$0xff]
        %v1708 = vld [vmem:[%s229 + $0x190] sm:$0xff]
        %v1709 = vld [vmem:[%s229 + $0x198] sm:$0xff]
        %v1710 = vld [vmem:[%s229 + $0x1a0] sm:$0xff]
        %v1711 = vld [vmem:[%s229 + $0x1a8] sm:$0xff]
        %v1712 = vld [vmem:[%s229 + $0x1b0] sm:$0xff]
        %v1713 = vld [vmem:[%s229 + $0x1b8] sm:$0xff]
        %v1714 = vld [vmem:[%s229 + $0x1c0] sm:$0xff]
        %v1715 = vld [vmem:[%s229 + $0x1c8] sm:$0xff]
        %v1716 = vld [vmem:[%s229 + $0x1d0] sm:$0xff]
        %v1717 = vld [vmem:[%s229 + $0x1d8] sm:$0xff]
        %v1718 = vld [vmem:[%s229 + $0x1e0] sm:$0xff]
        %v1719 = vld [vmem:[%s229 + $0x1e8] sm:$0xff]
        %v1720 = vld [vmem:[%s229 + $0x1f0] sm:$0xff]
        %v1721 = vld [vmem:[%s229 + $0x1f8] sm:$0xff]
        %v1722 = vld [vmem:[%s229 + $0x200] sm:$0xff]
        %v1723 = vld [vmem:[%s229 + $0x208] sm:$0xff]
        %v1724 = vld [vmem:[%s229 + $0x210] sm:$0xff]
        %v1725 = vld [vmem:[%s229 + $0x218] sm:$0xff]
        %v1726 = vld [vmem:[%s229 + $0x220] sm:$0xff]
        %v1727 = vld [vmem:[%s229 + $0x228] sm:$0xff]
        %v1728 = vld [vmem:[%s229 + $0x230] sm:$0xff]
        %v1729 = vld [vmem:[%s229 + $0x238] sm:$0xff]
        %s1730 = scalar_lea.vmem %s233, 24
        %v1731 = vld [vmem:[%s1730] sm:$0xf]
        %v1733 = vsel %vm312, %v1666, 0
        %v1736 = vsel %vm312, %v1667, 0
        %v1739 = vsel %vm312, %v1668, 0
        %v1742 = vsel %vm312, %v1669, 0
        %v1745 = vsel %vm312, %v1670, 0
        %v1748 = vsel %vm312, %v1671, 0
        %v1751 = vsel %vm312, %v1672, 0
        %v1754 = vsel %vm312, %v1673, 0
        %v1757 = vsel %vm312, %v1674, 0
        %v1760 = vsel %vm312, %v1675, 0
        %v1763 = vsel %vm312, %v1676, 0
        %v1766 = vsel %vm312, %v1677, 0
        %v1769 = vsel %vm312, %v1678, 0
        %v1772 = vsel %vm312, %v1679, 0
        %v1775 = vsel %vm312, %v1680, 0
        %v1778 = vsel %vm312, %v1681, 0
        %v1781 = vsel %vm312, %v1682, 0
        %v1784 = vsel %vm312, %v1683, 0
        %v1787 = vsel %vm312, %v1684, 0
        %v1790 = vsel %vm312, %v1685, 0
        %v1793 = vsel %vm312, %v1686, 0
        %v1796 = vsel %vm312, %v1687, 0
        %v1799 = vsel %vm312, %v1688, 0
        %v1802 = vsel %vm312, %v1689, 0
        %v1805 = vsel %vm312, %v1690, 0
        %v1808 = vsel %vm312, %v1691, 0
        %v1811 = vsel %vm312, %v1692, 0
        %v1814 = vsel %vm312, %v1693, 0
        %v1817 = vsel %vm312, %v1694, 0
        %v1820 = vsel %vm312, %v1695, 0
        %v1823 = vsel %vm312, %v1696, 0
        %v1826 = vsel %vm312, %v1697, 0
        %v1829 = vsel %vm312, %v1698, 0
        %v1832 = vsel %vm312, %v1699, 0
        %v1835 = vsel %vm312, %v1700, 0
        %v1838 = vsel %vm312, %v1701, 0
        %v1841 = vsel %vm312, %v1702, 0
        %v1844 = vsel %vm312, %v1703, 0
        %v1847 = vsel %vm312, %v1704, 0
        %v1850 = vsel %vm312, %v1705, 0
        %v1853 = vsel %vm312, %v1706, 0
        %v1856 = vsel %vm312, %v1707, 0
        %v1859 = vsel %vm312, %v1708, 0
        %v1862 = vsel %vm312, %v1709, 0
        %v1865 = vsel %vm312, %v1710, 0
        %v1868 = vsel %vm312, %v1711, 0
        %v1871 = vsel %vm312, %v1712, 0
        %v1874 = vsel %vm312, %v1713, 0
        %v1877 = vsel %vm312, %v1714, 0
        %v1880 = vsel %vm312, %v1715, 0
        %v1883 = vsel %vm312, %v1716, 0
        %v1886 = vsel %vm312, %v1717, 0
        %v1889 = vsel %vm312, %v1718, 0
        %v1892 = vsel %vm312, %v1719, 0
        %v1895 = vsel %vm312, %v1720, 0
        %v1898 = vsel %vm312, %v1721, 0
        %v1901 = vsel %vm312, %v1722, 0
        %v1904 = vsel %vm312, %v1723, 0
        %v1907 = vsel %vm312, %v1724, 0
        %v1910 = vsel %vm312, %v1725, 0
        %v1913 = vsel %vm312, %v1726, 0
        %v1916 = vsel %vm312, %v1727, 0
        %v1919 = vsel %vm312, %v1728, 0
        %v1922 = vsel %vm312, %v1729, 0
        %v1925 = vsel %vm505, %v1731, 0
        %1927 = vmatpush.msra.mxu0 0.0
        %1928 = vmatpush.msra.mxu0 0.0
        %1929 = vmatpush.msra.mxu0 0.0
        %1930 = vmatpush.msra.mxu0 0.0
        %1931 = vmatpush.msra.mxu0 0.0
        %1932 = vmatpush.msra.mxu0 0.0
        %1933 = vmatpush.msra.mxu0 0.0
        %1934 = vmatpush.msra.mxu0 0.0
        %1935 = vmatpush.msra.mxu0 0.0
        %1936 = vmatpush.msra.mxu0 0.0
        %1937 = vmatpush.msra.mxu0 0.0
        %1938 = vmatpush.msra.mxu0 0.0
        %1939 = vmatpush.msra.mxu0 0.0
        %1940 = vmatpush.msra.mxu0 0.0
        %1941 = vmatpush.msra.mxu0 0.0
        %1942 = vmatpush.msra.mxu0 %v1925
        %1943 = vmatmul.f32.gmra.mxu0 %v1733
        %v1944 = vpop.f32.mrf.mxu0
        %v1945 = vadd.f32 0.0, %v1944
        %1946 = vmatmul.f32.gmra.mxu0 %v1736
        %v1947 = vpop.f32.mrf.mxu0
        %v1948 = vadd.f32 0.0, %v1947
        %1949 = vmatmul.f32.gmra.mxu0 %v1739
        %v1950 = vpop.f32.mrf.mxu0
        %1951 = vmatmul.f32.gmra.mxu0 %v1742
        %v1952 = vpop.f32.mrf.mxu0
        %1953 = vmatmul.f32.gmra.mxu0 %v1745
        %v1954 = vpop.f32.mrf.mxu0
        %v1955 = vadd.f32 0.0, %v1954
        %1956 = vmatmul.f32.gmra.mxu0 %v1748
        %v1957 = vpop.f32.mrf.mxu0
        %v1958 = vadd.f32 0.0, %v1957
        %1959 = vmatmul.f32.gmra.mxu0 %v1751
        %v1960 = vpop.f32.mrf.mxu0
        %1961 = vmatmul.f32.gmra.mxu0 %v1754
        %v1962 = vpop.f32.mrf.mxu0
        %1963 = vmatmul.f32.gmra.mxu0 %v1757
        %v1964 = vpop.f32.mrf.mxu0
        %v1965 = vadd.f32 0.0, %v1964
        %1966 = vmatmul.f32.gmra.mxu0 %v1760
        %v1967 = vpop.f32.mrf.mxu0
        %v1968 = vadd.f32 0.0, %v1967
        %1969 = vmatmul.f32.gmra.mxu0 %v1763
        %v1970 = vpop.f32.mrf.mxu0
        %1971 = vmatmul.f32.gmra.mxu0 %v1766
        %v1972 = vpop.f32.mrf.mxu0
        %1973 = vmatmul.f32.gmra.mxu0 %v1769
        %v1974 = vpop.f32.mrf.mxu0
        %v1975 = vadd.f32 0.0, %v1974
        %1976 = vmatmul.f32.gmra.mxu0 %v1772
        %v1977 = vpop.f32.mrf.mxu0
        %v1978 = vadd.f32 0.0, %v1977
        %1979 = vmatmul.f32.gmra.mxu0 %v1775
        %v1980 = vpop.f32.mrf.mxu0
        %1981 = vmatmul.f32.gmra.mxu0 %v1778
        %v1982 = vpop.f32.mrf.mxu0
        %1983 = vmatmul.f32.gmra.mxu0 %v1781
        %v1984 = vpop.f32.mrf.mxu0
        %v1985 = vadd.f32 0.0, %v1984
        %1986 = vmatmul.f32.gmra.mxu0 %v1784
        %v1987 = vpop.f32.mrf.mxu0
        %v1988 = vadd.f32 0.0, %v1987
        %1989 = vmatmul.f32.gmra.mxu0 %v1787
        %v1990 = vpop.f32.mrf.mxu0
        %1991 = vmatmul.f32.gmra.mxu0 %v1790
        %v1992 = vpop.f32.mrf.mxu0
        %1993 = vmatmul.f32.gmra.mxu0 %v1793
        %v1994 = vpop.f32.mrf.mxu0
        %v1995 = vadd.f32 0.0, %v1994
        %1996 = vmatmul.f32.gmra.mxu0 %v1796
        %v1997 = vpop.f32.mrf.mxu0
        %v1998 = vadd.f32 0.0, %v1997
        %1999 = vmatmul.f32.gmra.mxu0 %v1799
        %v2000 = vpop.f32.mrf.mxu0
        %2001 = vmatmul.f32.gmra.mxu0 %v1802
        %v2002 = vpop.f32.mrf.mxu0
        %2003 = vmatmul.f32.gmra.mxu0 %v1805
        %v2004 = vpop.f32.mrf.mxu0
        %v2005 = vadd.f32 0.0, %v2004
        %2006 = vmatmul.f32.gmra.mxu0 %v1808
        %v2007 = vpop.f32.mrf.mxu0
        %v2008 = vadd.f32 0.0, %v2007
        %2009 = vmatmul.f32.gmra.mxu0 %v1811
        %v2010 = vpop.f32.mrf.mxu0
        %2011 = vmatmul.f32.gmra.mxu0 %v1814
        %v2012 = vpop.f32.mrf.mxu0
        %2013 = vmatmul.f32.gmra.mxu0 %v1817
        %v2014 = vpop.f32.mrf.mxu0
        %v2015 = vadd.f32 0.0, %v2014
        %2016 = vmatmul.f32.gmra.mxu0 %v1820
        %v2017 = vpop.f32.mrf.mxu0
        %v2018 = vadd.f32 0.0, %v2017
        %2019 = vmatmul.f32.gmra.mxu0 %v1823
        %v2020 = vpop.f32.mrf.mxu0
        %2021 = vmatmul.f32.gmra.mxu0 %v1826
        %v2022 = vpop.f32.mrf.mxu0
        %2023 = vmatmul.f32.gmra.mxu0 %v1829
        %v2024 = vpop.f32.mrf.mxu0
        %v2025 = vadd.f32 0.0, %v2024
        %2026 = vmatmul.f32.gmra.mxu0 %v1832
        %v2027 = vpop.f32.mrf.mxu0
        %v2028 = vadd.f32 0.0, %v2027
        %2029 = vmatmul.f32.gmra.mxu0 %v1835
        %v2030 = vpop.f32.mrf.mxu0
        %2031 = vmatmul.f32.gmra.mxu0 %v1838
        %v2032 = vpop.f32.mrf.mxu0
        %2033 = vmatmul.f32.gmra.mxu0 %v1841
        %v2034 = vpop.f32.mrf.mxu0
        %v2035 = vadd.f32 0.0, %v2034
        %2036 = vmatmul.f32.gmra.mxu0 %v1844
        %v2037 = vpop.f32.mrf.mxu0
        %v2038 = vadd.f32 0.0, %v2037
        %2039 = vmatmul.f32.gmra.mxu0 %v1847
        %v2040 = vpop.f32.mrf.mxu0
        %2041 = vmatmul.f32.gmra.mxu0 %v1850
        %v2042 = vpop.f32.mrf.mxu0
        %2043 = vmatmul.f32.gmra.mxu0 %v1853
        %v2044 = vpop.f32.mrf.mxu0
        %v2045 = vadd.f32 0.0, %v2044
        %2046 = vmatmul.f32.gmra.mxu0 %v1856
        %v2047 = vpop.f32.mrf.mxu0
        %v2048 = vadd.f32 0.0, %v2047
        %2049 = vmatmul.f32.gmra.mxu0 %v1859
        %v2050 = vpop.f32.mrf.mxu0
        %2051 = vmatmul.f32.gmra.mxu0 %v1862
        %v2052 = vpop.f32.mrf.mxu0
        %2053 = vmatmul.f32.gmra.mxu0 %v1865
        %v2054 = vpop.f32.mrf.mxu0
        %v2055 = vadd.f32 0.0, %v2054
        %2056 = vmatmul.f32.gmra.mxu0 %v1868
        %v2057 = vpop.f32.mrf.mxu0
        %v2058 = vadd.f32 0.0, %v2057
        %2059 = vmatmul.f32.gmra.mxu0 %v1871
        %v2060 = vpop.f32.mrf.mxu0
        %2061 = vmatmul.f32.gmra.mxu0 %v1874
        %v2062 = vpop.f32.mrf.mxu0
        %2063 = vmatmul.f32.gmra.mxu0 %v1877
        %v2064 = vpop.f32.mrf.mxu0
        %v2065 = vadd.f32 0.0, %v2064
        %2066 = vmatmul.f32.gmra.mxu0 %v1880
        %v2067 = vpop.f32.mrf.mxu0
        %v2068 = vadd.f32 0.0, %v2067
        %2069 = vmatmul.f32.gmra.mxu0 %v1883
        %v2070 = vpop.f32.mrf.mxu0
        %2071 = vmatmul.f32.gmra.mxu0 %v1886
        %v2072 = vpop.f32.mrf.mxu0
        %2073 = vmatmul.f32.gmra.mxu0 %v1889
        %v2074 = vpop.f32.mrf.mxu0
        %v2075 = vadd.f32 0.0, %v2074
        %2076 = vmatmul.f32.gmra.mxu0 %v1892
        %v2077 = vpop.f32.mrf.mxu0
        %v2078 = vadd.f32 0.0, %v2077
        %2079 = vmatmul.f32.gmra.mxu0 %v1895
        %v2080 = vpop.f32.mrf.mxu0
        %2081 = vmatmul.f32.gmra.mxu0 %v1898
        %v2082 = vpop.f32.mrf.mxu0
        %2083 = vmatmul.f32.gmra.mxu0 %v1901
        %v2084 = vpop.f32.mrf.mxu0
        %v2085 = vadd.f32 0.0, %v2084
        %2086 = vmatmul.f32.gmra.mxu0 %v1904
        %v2087 = vpop.f32.mrf.mxu0
        %v2088 = vadd.f32 0.0, %v2087
        %2089 = vmatmul.f32.gmra.mxu0 %v1907
        %v2090 = vpop.f32.mrf.mxu0
        %2091 = vmatmul.f32.gmra.mxu0 %v1910
        %v2092 = vpop.f32.mrf.mxu0
        %2093 = vmatmul.f32.gmra.mxu0 %v1913
        %v2094 = vpop.f32.mrf.mxu0
        %v2095 = vadd.f32 0.0, %v2094
        %2096 = vmatmul.f32.gmra.mxu0 %v1916
        %v2097 = vpop.f32.mrf.mxu0
        %v2098 = vadd.f32 0.0, %v2097
        %2099 = vmatmul.f32.gmra.mxu0 %v1919
        %v2100 = vpop.f32.mrf.mxu0
        %2101 = vmatmul.f32.gmra.mxu0 %v1922
        %v2102 = vpop.f32.mrf.mxu0
        %2103 = vdwg.mxu0
        %v2104 = vadd.f32 %v719, %v1945
        %v2105 = vadd.f32 %v722, %v1948
        %v2106 = vadd.f32 %v729, %v1955
        %v2107 = vadd.f32 %v732, %v1958
        %v2108 = vadd.f32 %v739, %v1965
        %v2109 = vadd.f32 %v742, %v1968
        %v2110 = vadd.f32 %v749, %v1975
        %v2111 = vadd.f32 %v752, %v1978
        %v2112 = vadd.f32 %v759, %v1985
        %v2113 = vadd.f32 %v762, %v1988
        %v2114 = vadd.f32 %v769, %v1995
        %v2115 = vadd.f32 %v772, %v1998
        %v2116 = vadd.f32 %v779, %v2005
        %v2117 = vadd.f32 %v782, %v2008
        %v2118 = vadd.f32 %v789, %v2015
        %v2119 = vadd.f32 %v792, %v2018
        %v2120 = vadd.f32 %v799, %v2025
        %v2121 = vadd.f32 %v802, %v2028
        %v2122 = vadd.f32 %v809, %v2035
        %v2123 = vadd.f32 %v812, %v2038
        %v2124 = vadd.f32 %v819, %v2045
        %v2125 = vadd.f32 %v822, %v2048
        %v2126 = vadd.f32 %v829, %v2055
        %v2127 = vadd.f32 %v832, %v2058
        %v2128 = vadd.f32 %v839, %v2065
        %v2129 = vadd.f32 %v842, %v2068
        %v2130 = vadd.f32 %v849, %v2075
        %v2131 = vadd.f32 %v852, %v2078
        %v2132 = vadd.f32 %v859, %v2085
        %v2133 = vadd.f32 %v862, %v2088
        %v2134 = vadd.f32 %v869, %v2095
        %v2135 = vadd.f32 %v872, %v2098
        %s2136 = scalar_lea.vmem %s233, 28
        %v2137 = vld [vmem:[%s2136] sm:$0xf]
        %v2139 = vsel %vm505, %v2137, 0
        %2141 = vmatpush.msra.mxu0 0.0
        %2142 = vmatpush.msra.mxu0 0.0
        %2143 = vmatpush.msra.mxu0 0.0
        %2144 = vmatpush.msra.mxu0 0.0
        %2145 = vmatpush.msra.mxu0 0.0
        %2146 = vmatpush.msra.mxu0 0.0
        %2147 = vmatpush.msra.mxu0 0.0
        %2148 = vmatpush.msra.mxu0 0.0
        %2149 = vmatpush.msra.mxu0 0.0
        %2150 = vmatpush.msra.mxu0 0.0
        %2151 = vmatpush.msra.mxu0 0.0
        %2152 = vmatpush.msra.mxu0 0.0
        %2153 = vmatpush.msra.mxu0 0.0
        %2154 = vmatpush.msra.mxu0 0.0
        %2155 = vmatpush.msra.mxu0 0.0
        %2156 = vmatpush.msra.mxu0 %v2139
        %2157 = vmatmul.f32.gmra.mxu0 %v1733
        %v2158 = vpop.f32.mrf.mxu0
        %v2159 = vadd.f32 0.0, %v2158
        %2160 = vmatmul.f32.gmra.mxu0 %v1736
        %v2161 = vpop.f32.mrf.mxu0
        %v2162 = vadd.f32 0.0, %v2161
        %2163 = vmatmul.f32.gmra.mxu0 %v1739
        %v2164 = vpop.f32.mrf.mxu0
        %v2165 = vadd.f32 0.0, %v2164
        %2166 = vmatmul.f32.gmra.mxu0 %v1742
        %v2167 = vpop.f32.mrf.mxu0
        %2168 = vmatmul.f32.gmra.mxu0 %v1745
        %v2169 = vpop.f32.mrf.mxu0
        %v2170 = vadd.f32 0.0, %v2169
        %2171 = vmatmul.f32.gmra.mxu0 %v1748
        %v2172 = vpop.f32.mrf.mxu0
        %v2173 = vadd.f32 0.0, %v2172
        %2174 = vmatmul.f32.gmra.mxu0 %v1751
        %v2175 = vpop.f32.mrf.mxu0
        %v2176 = vadd.f32 0.0, %v2175
        %2177 = vmatmul.f32.gmra.mxu0 %v1754
        %v2178 = vpop.f32.mrf.mxu0
        %2179 = vmatmul.f32.gmra.mxu0 %v1757
        %v2180 = vpop.f32.mrf.mxu0
        %v2181 = vadd.f32 0.0, %v2180
        %2182 = vmatmul.f32.gmra.mxu0 %v1760
        %v2183 = vpop.f32.mrf.mxu0
        %v2184 = vadd.f32 0.0, %v2183
        %2185 = vmatmul.f32.gmra.mxu0 %v1763
        %v2186 = vpop.f32.mrf.mxu0
        %v2187 = vadd.f32 0.0, %v2186
        %2188 = vmatmul.f32.gmra.mxu0 %v1766
        %v2189 = vpop.f32.mrf.mxu0
        %2190 = vmatmul.f32.gmra.mxu0 %v1769
        %v2191 = vpop.f32.mrf.mxu0
        %v2192 = vadd.f32 0.0, %v2191
        %2193 = vmatmul.f32.gmra.mxu0 %v1772
        %v2194 = vpop.f32.mrf.mxu0
        %v2195 = vadd.f32 0.0, %v2194
        %2196 = vmatmul.f32.gmra.mxu0 %v1775
        %v2197 = vpop.f32.mrf.mxu0
        %v2198 = vadd.f32 0.0, %v2197
        %2199 = vmatmul.f32.gmra.mxu0 %v1778
        %v2200 = vpop.f32.mrf.mxu0
        %2201 = vmatmul.f32.gmra.mxu0 %v1781
        %v2202 = vpop.f32.mrf.mxu0
        %v2203 = vadd.f32 0.0, %v2202
        %2204 = vmatmul.f32.gmra.mxu0 %v1784
        %v2205 = vpop.f32.mrf.mxu0
        %v2206 = vadd.f32 0.0, %v2205
        %2207 = vmatmul.f32.gmra.mxu0 %v1787
        %v2208 = vpop.f32.mrf.mxu0
        %v2209 = vadd.f32 0.0, %v2208
        %2210 = vmatmul.f32.gmra.mxu0 %v1790
        %v2211 = vpop.f32.mrf.mxu0
        %2212 = vmatmul.f32.gmra.mxu0 %v1793
        %v2213 = vpop.f32.mrf.mxu0
        %v2214 = vadd.f32 0.0, %v2213
        %2215 = vmatmul.f32.gmra.mxu0 %v1796
        %v2216 = vpop.f32.mrf.mxu0
        %v2217 = vadd.f32 0.0, %v2216
        %2218 = vmatmul.f32.gmra.mxu0 %v1799
        %v2219 = vpop.f32.mrf.mxu0
        %v2220 = vadd.f32 0.0, %v2219
        %2221 = vmatmul.f32.gmra.mxu0 %v1802
        %v2222 = vpop.f32.mrf.mxu0
        %2223 = vmatmul.f32.gmra.mxu0 %v1805
        %v2224 = vpop.f32.mrf.mxu0
        %v2225 = vadd.f32 0.0, %v2224
        %2226 = vmatmul.f32.gmra.mxu0 %v1808
        %v2227 = vpop.f32.mrf.mxu0
        %v2228 = vadd.f32 0.0, %v2227
        %2229 = vmatmul.f32.gmra.mxu0 %v1811
        %v2230 = vpop.f32.mrf.mxu0
        %v2231 = vadd.f32 0.0, %v2230
        %2232 = vmatmul.f32.gmra.mxu0 %v1814
        %v2233 = vpop.f32.mrf.mxu0
        %2234 = vmatmul.f32.gmra.mxu0 %v1817
        %v2235 = vpop.f32.mrf.mxu0
        %v2236 = vadd.f32 0.0, %v2235
        %2237 = vmatmul.f32.gmra.mxu0 %v1820
        %v2238 = vpop.f32.mrf.mxu0
        %v2239 = vadd.f32 0.0, %v2238
        %2240 = vmatmul.f32.gmra.mxu0 %v1823
        %v2241 = vpop.f32.mrf.mxu0
        %v2242 = vadd.f32 0.0, %v2241
        %2243 = vmatmul.f32.gmra.mxu0 %v1826
        %v2244 = vpop.f32.mrf.mxu0
        %2245 = vmatmul.f32.gmra.mxu0 %v1829
        %v2246 = vpop.f32.mrf.mxu0
        %v2247 = vadd.f32 0.0, %v2246
        %2248 = vmatmul.f32.gmra.mxu0 %v1832
        %v2249 = vpop.f32.mrf.mxu0
        %v2250 = vadd.f32 0.0, %v2249
        %2251 = vmatmul.f32.gmra.mxu0 %v1835
        %v2252 = vpop.f32.mrf.mxu0
        %v2253 = vadd.f32 0.0, %v2252
        %2254 = vmatmul.f32.gmra.mxu0 %v1838
        %v2255 = vpop.f32.mrf.mxu0
        %2256 = vmatmul.f32.gmra.mxu0 %v1841
        %v2257 = vpop.f32.mrf.mxu0
        %v2258 = vadd.f32 0.0, %v2257
        %2259 = vmatmul.f32.gmra.mxu0 %v1844
        %v2260 = vpop.f32.mrf.mxu0
        %v2261 = vadd.f32 0.0, %v2260
        %2262 = vmatmul.f32.gmra.mxu0 %v1847
        %v2263 = vpop.f32.mrf.mxu0
        %v2264 = vadd.f32 0.0, %v2263
        %2265 = vmatmul.f32.gmra.mxu0 %v1850
        %v2266 = vpop.f32.mrf.mxu0
        %2267 = vmatmul.f32.gmra.mxu0 %v1853
        %v2268 = vpop.f32.mrf.mxu0
        %v2269 = vadd.f32 0.0, %v2268
        %2270 = vmatmul.f32.gmra.mxu0 %v1856
        %v2271 = vpop.f32.mrf.mxu0
        %v2272 = vadd.f32 0.0, %v2271
        %2273 = vmatmul.f32.gmra.mxu0 %v1859
        %v2274 = vpop.f32.mrf.mxu0
        %v2275 = vadd.f32 0.0, %v2274
        %2276 = vmatmul.f32.gmra.mxu0 %v1862
        %v2277 = vpop.f32.mrf.mxu0
        %2278 = vmatmul.f32.gmra.mxu0 %v1865
        %v2279 = vpop.f32.mrf.mxu0
        %v2280 = vadd.f32 0.0, %v2279
        %2281 = vmatmul.f32.gmra.mxu0 %v1868
        %v2282 = vpop.f32.mrf.mxu0
        %v2283 = vadd.f32 0.0, %v2282
        %2284 = vmatmul.f32.gmra.mxu0 %v1871
        %v2285 = vpop.f32.mrf.mxu0
        %v2286 = vadd.f32 0.0, %v2285
        %2287 = vmatmul.f32.gmra.mxu0 %v1874
        %v2288 = vpop.f32.mrf.mxu0
        %2289 = vmatmul.f32.gmra.mxu0 %v1877
        %v2290 = vpop.f32.mrf.mxu0
        %v2291 = vadd.f32 0.0, %v2290
        %2292 = vmatmul.f32.gmra.mxu0 %v1880
        %v2293 = vpop.f32.mrf.mxu0
        %v2294 = vadd.f32 0.0, %v2293
        %2295 = vmatmul.f32.gmra.mxu0 %v1883
        %v2296 = vpop.f32.mrf.mxu0
        %v2297 = vadd.f32 0.0, %v2296
        %2298 = vmatmul.f32.gmra.mxu0 %v1886
        %v2299 = vpop.f32.mrf.mxu0
        %2300 = vmatmul.f32.gmra.mxu0 %v1889
        %v2301 = vpop.f32.mrf.mxu0
        %v2302 = vadd.f32 0.0, %v2301
        %2303 = vmatmul.f32.gmra.mxu0 %v1892
        %v2304 = vpop.f32.mrf.mxu0
        %v2305 = vadd.f32 0.0, %v2304
        %2306 = vmatmul.f32.gmra.mxu0 %v1895
        %v2307 = vpop.f32.mrf.mxu0
        %v2308 = vadd.f32 0.0, %v2307
        %2309 = vmatmul.f32.gmra.mxu0 %v1898
        %v2310 = vpop.f32.mrf.mxu0
        %2311 = vmatmul.f32.gmra.mxu0 %v1901
        %v2312 = vpop.f32.mrf.mxu0
        %v2313 = vadd.f32 0.0, %v2312
        %2314 = vmatmul.f32.gmra.mxu0 %v1904
        %v2315 = vpop.f32.mrf.mxu0
        %v2316 = vadd.f32 0.0, %v2315
        %2317 = vmatmul.f32.gmra.mxu0 %v1907
        %v2318 = vpop.f32.mrf.mxu0
        %v2319 = vadd.f32 0.0, %v2318
        %2320 = vmatmul.f32.gmra.mxu0 %v1910
        %v2321 = vpop.f32.mrf.mxu0
        %2322 = vmatmul.f32.gmra.mxu0 %v1913
        %v2323 = vpop.f32.mrf.mxu0
        %v2324 = vadd.f32 0.0, %v2323
        %2325 = vmatmul.f32.gmra.mxu0 %v1916
        %v2326 = vpop.f32.mrf.mxu0
        %v2327 = vadd.f32 0.0, %v2326
        %2328 = vmatmul.f32.gmra.mxu0 %v1919
        %v2329 = vpop.f32.mrf.mxu0
        %v2330 = vadd.f32 0.0, %v2329
        %2331 = vmatmul.f32.gmra.mxu0 %v1922
        %v2332 = vpop.f32.mrf.mxu0
        %2333 = vdwg.mxu0
        %v2334 = vadd.f32 %v1097, %v2159
        %v2335 = vadd.f32 %v1100, %v2162
        %v2336 = vadd.f32 %v1103, %v2165
        %v2337 = vadd.f32 %v1108, %v2170
        %v2338 = vadd.f32 %v1111, %v2173
        %v2339 = vadd.f32 %v1114, %v2176
        %v2340 = vadd.f32 %v1119, %v2181
        %v2341 = vadd.f32 %v1122, %v2184
        %v2342 = vadd.f32 %v1125, %v2187
        %v2343 = vadd.f32 %v1130, %v2192
        %v2344 = vadd.f32 %v1133, %v2195
        %v2345 = vadd.f32 %v1136, %v2198
        %v2346 = vadd.f32 %v1141, %v2203
        %v2347 = vadd.f32 %v1144, %v2206
        %v2348 = vadd.f32 %v1147, %v2209
        %v2349 = vadd.f32 %v1152, %v2214
        %v2350 = vadd.f32 %v1155, %v2217
        %v2351 = vadd.f32 %v1158, %v2220
        %v2352 = vadd.f32 %v1163, %v2225
        %v2353 = vadd.f32 %v1166, %v2228
        %v2354 = vadd.f32 %v1169, %v2231
        %v2355 = vadd.f32 %v1174, %v2236
        %v2356 = vadd.f32 %v1177, %v2239
        %v2357 = vadd.f32 %v1180, %v2242
        %v2358 = vadd.f32 %v1185, %v2247
        %v2359 = vadd.f32 %v1188, %v2250
        %v2360 = vadd.f32 %v1191, %v2253
        %v2361 = vadd.f32 %v1196, %v2258
        %v2362 = vadd.f32 %v1199, %v2261
        %v2363 = vadd.f32 %v1202, %v2264
        %v2364 = vadd.f32 %v1207, %v2269
        %v2365 = vadd.f32 %v1210, %v2272
        %v2366 = vadd.f32 %v1213, %v2275
        %v2367 = vadd.f32 %v1218, %v2280
        %v2368 = vadd.f32 %v1221, %v2283
        %v2369 = vadd.f32 %v1224, %v2286
        %v2370 = vadd.f32 %v1229, %v2291
        %v2371 = vadd.f32 %v1232, %v2294
        %v2372 = vadd.f32 %v1235, %v2297
        %v2373 = vadd.f32 %v1240, %v2302
        %v2374 = vadd.f32 %v1243, %v2305
        %v2375 = vadd.f32 %v1246, %v2308
        %v2376 = vadd.f32 %v1251, %v2313
        %v2377 = vadd.f32 %v1254, %v2316
        %v2378 = vadd.f32 %v1257, %v2319
        %v2379 = vadd.f32 %v1262, %v2324
        %v2380 = vadd.f32 %v1265, %v2327
        %v2381 = vadd.f32 %v1268, %v2330
        %s2382 = scalar_lea.vmem %s233, 32
        %v2383 = vld [vmem:[%s2382] sm:$0xf]
        %v2385 = vsel %vm505, %v2383, 0
        %2387 = vmatpush.msra.mxu0 0.0
        %2388 = vmatpush.msra.mxu0 0.0
        %2389 = vmatpush.msra.mxu0 0.0
        %2390 = vmatpush.msra.mxu0 0.0
        %2391 = vmatpush.msra.mxu0 0.0
        %2392 = vmatpush.msra.mxu0 0.0
        %2393 = vmatpush.msra.mxu0 0.0
        %2394 = vmatpush.msra.mxu0 0.0
        %2395 = vmatpush.msra.mxu0 0.0
        %2396 = vmatpush.msra.mxu0 0.0
        %2397 = vmatpush.msra.mxu0 0.0
        %2398 = vmatpush.msra.mxu0 0.0
        %2399 = vmatpush.msra.mxu0 0.0
        %2400 = vmatpush.msra.mxu0 0.0
        %2401 = vmatpush.msra.mxu0 0.0
        %2402 = vmatpush.msra.mxu0 %v2385
        %2403 = vmatmul.f32.gmra.mxu0 %v1733
        %v2404 = vpop.f32.mrf.mxu0
        %v2405 = vadd.f32 0.0, %v2404
        %2406 = vmatmul.f32.gmra.mxu0 %v1736
        %v2407 = vpop.f32.mrf.mxu0
        %v2408 = vadd.f32 0.0, %v2407
        %2409 = vmatmul.f32.gmra.mxu0 %v1739
        %v2410 = vpop.f32.mrf.mxu0
        %v2411 = vadd.f32 0.0, %v2410
        %2412 = vmatmul.f32.gmra.mxu0 %v1742
        %v2413 = vpop.f32.mrf.mxu0
        %2414 = vmatmul.f32.gmra.mxu0 %v1745
        %v2415 = vpop.f32.mrf.mxu0
        %v2416 = vadd.f32 0.0, %v2415
        %2417 = vmatmul.f32.gmra.mxu0 %v1748
        %v2418 = vpop.f32.mrf.mxu0
        %v2419 = vadd.f32 0.0, %v2418
        %2420 = vmatmul.f32.gmra.mxu0 %v1751
        %v2421 = vpop.f32.mrf.mxu0
        %v2422 = vadd.f32 0.0, %v2421
        %2423 = vmatmul.f32.gmra.mxu0 %v1754
        %v2424 = vpop.f32.mrf.mxu0
        %2425 = vmatmul.f32.gmra.mxu0 %v1757
        %v2426 = vpop.f32.mrf.mxu0
        %v2427 = vadd.f32 0.0, %v2426
        %2428 = vmatmul.f32.gmra.mxu0 %v1760
        %v2429 = vpop.f32.mrf.mxu0
        %v2430 = vadd.f32 0.0, %v2429
        %2431 = vmatmul.f32.gmra.mxu0 %v1763
        %v2432 = vpop.f32.mrf.mxu0
        %v2433 = vadd.f32 0.0, %v2432
        %2434 = vmatmul.f32.gmra.mxu0 %v1766
        %v2435 = vpop.f32.mrf.mxu0
        %2436 = vmatmul.f32.gmra.mxu0 %v1769
        %v2437 = vpop.f32.mrf.mxu0
        %v2438 = vadd.f32 0.0, %v2437
        %2439 = vmatmul.f32.gmra.mxu0 %v1772
        %v2440 = vpop.f32.mrf.mxu0
        %v2441 = vadd.f32 0.0, %v2440
        %2442 = vmatmul.f32.gmra.mxu0 %v1775
        %v2443 = vpop.f32.mrf.mxu0
        %v2444 = vadd.f32 0.0, %v2443
        %2445 = vmatmul.f32.gmra.mxu0 %v1778
        %v2446 = vpop.f32.mrf.mxu0
        %2447 = vmatmul.f32.gmra.mxu0 %v1781
        %v2448 = vpop.f32.mrf.mxu0
        %v2449 = vadd.f32 0.0, %v2448
        %2450 = vmatmul.f32.gmra.mxu0 %v1784
        %v2451 = vpop.f32.mrf.mxu0
        %v2452 = vadd.f32 0.0, %v2451
        %2453 = vmatmul.f32.gmra.mxu0 %v1787
        %v2454 = vpop.f32.mrf.mxu0
        %v2455 = vadd.f32 0.0, %v2454
        %2456 = vmatmul.f32.gmra.mxu0 %v1790
        %v2457 = vpop.f32.mrf.mxu0
        %2458 = vmatmul.f32.gmra.mxu0 %v1793
        %v2459 = vpop.f32.mrf.mxu0
        %v2460 = vadd.f32 0.0, %v2459
        %2461 = vmatmul.f32.gmra.mxu0 %v1796
        %v2462 = vpop.f32.mrf.mxu0
        %v2463 = vadd.f32 0.0, %v2462
        %2464 = vmatmul.f32.gmra.mxu0 %v1799
        %v2465 = vpop.f32.mrf.mxu0
        %v2466 = vadd.f32 0.0, %v2465
        %2467 = vmatmul.f32.gmra.mxu0 %v1802
        %v2468 = vpop.f32.mrf.mxu0
        %2469 = vmatmul.f32.gmra.mxu0 %v1805
        %v2470 = vpop.f32.mrf.mxu0
        %v2471 = vadd.f32 0.0, %v2470
        %2472 = vmatmul.f32.gmra.mxu0 %v1808
        %v2473 = vpop.f32.mrf.mxu0
        %v2474 = vadd.f32 0.0, %v2473
        %2475 = vmatmul.f32.gmra.mxu0 %v1811
        %v2476 = vpop.f32.mrf.mxu0
        %v2477 = vadd.f32 0.0, %v2476
        %2478 = vmatmul.f32.gmra.mxu0 %v1814
        %v2479 = vpop.f32.mrf.mxu0
        %2480 = vmatmul.f32.gmra.mxu0 %v1817
        %v2481 = vpop.f32.mrf.mxu0
        %v2482 = vadd.f32 0.0, %v2481
        %2483 = vmatmul.f32.gmra.mxu0 %v1820
        %v2484 = vpop.f32.mrf.mxu0
        %v2485 = vadd.f32 0.0, %v2484
        %2486 = vmatmul.f32.gmra.mxu0 %v1823
        %v2487 = vpop.f32.mrf.mxu0
        %v2488 = vadd.f32 0.0, %v2487
        %2489 = vmatmul.f32.gmra.mxu0 %v1826
        %v2490 = vpop.f32.mrf.mxu0
        %2491 = vmatmul.f32.gmra.mxu0 %v1829
        %v2492 = vpop.f32.mrf.mxu0
        %v2493 = vadd.f32 0.0, %v2492
        %2494 = vmatmul.f32.gmra.mxu0 %v1832
        %v2495 = vpop.f32.mrf.mxu0
        %v2496 = vadd.f32 0.0, %v2495
        %2497 = vmatmul.f32.gmra.mxu0 %v1835
        %v2498 = vpop.f32.mrf.mxu0
        %v2499 = vadd.f32 0.0, %v2498
        %2500 = vmatmul.f32.gmra.mxu0 %v1838
        %v2501 = vpop.f32.mrf.mxu0
        %2502 = vmatmul.f32.gmra.mxu0 %v1841
        %v2503 = vpop.f32.mrf.mxu0
        %v2504 = vadd.f32 0.0, %v2503
        %2505 = vmatmul.f32.gmra.mxu0 %v1844
        %v2506 = vpop.f32.mrf.mxu0
        %v2507 = vadd.f32 0.0, %v2506
        %2508 = vmatmul.f32.gmra.mxu0 %v1847
        %v2509 = vpop.f32.mrf.mxu0
        %v2510 = vadd.f32 0.0, %v2509
        %2511 = vmatmul.f32.gmra.mxu0 %v1850
        %v2512 = vpop.f32.mrf.mxu0
        %2513 = vmatmul.f32.gmra.mxu0 %v1853
        %v2514 = vpop.f32.mrf.mxu0
        %v2515 = vadd.f32 0.0, %v2514
        %2516 = vmatmul.f32.gmra.mxu0 %v1856
        %v2517 = vpop.f32.mrf.mxu0
        %v2518 = vadd.f32 0.0, %v2517
        %2519 = vmatmul.f32.gmra.mxu0 %v1859
        %v2520 = vpop.f32.mrf.mxu0
        %v2521 = vadd.f32 0.0, %v2520
        %2522 = vmatmul.f32.gmra.mxu0 %v1862
        %v2523 = vpop.f32.mrf.mxu0
        %2524 = vmatmul.f32.gmra.mxu0 %v1865
        %v2525 = vpop.f32.mrf.mxu0
        %v2526 = vadd.f32 0.0, %v2525
        %2527 = vmatmul.f32.gmra.mxu0 %v1868
        %v2528 = vpop.f32.mrf.mxu0
        %v2529 = vadd.f32 0.0, %v2528
        %2530 = vmatmul.f32.gmra.mxu0 %v1871
        %v2531 = vpop.f32.mrf.mxu0
        %v2532 = vadd.f32 0.0, %v2531
        %2533 = vmatmul.f32.gmra.mxu0 %v1874
        %v2534 = vpop.f32.mrf.mxu0
        %2535 = vmatmul.f32.gmra.mxu0 %v1877
        %v2536 = vpop.f32.mrf.mxu0
        %v2537 = vadd.f32 0.0, %v2536
        %2538 = vmatmul.f32.gmra.mxu0 %v1880
        %v2539 = vpop.f32.mrf.mxu0
        %v2540 = vadd.f32 0.0, %v2539
        %2541 = vmatmul.f32.gmra.mxu0 %v1883
        %v2542 = vpop.f32.mrf.mxu0
        %v2543 = vadd.f32 0.0, %v2542
        %2544 = vmatmul.f32.gmra.mxu0 %v1886
        %v2545 = vpop.f32.mrf.mxu0
        %2546 = vmatmul.f32.gmra.mxu0 %v1889
        %v2547 = vpop.f32.mrf.mxu0
        %v2548 = vadd.f32 0.0, %v2547
        %2549 = vmatmul.f32.gmra.mxu0 %v1892
        %v2550 = vpop.f32.mrf.mxu0
        %v2551 = vadd.f32 0.0, %v2550
        %2552 = vmatmul.f32.gmra.mxu0 %v1895
        %v2553 = vpop.f32.mrf.mxu0
        %v2554 = vadd.f32 0.0, %v2553
        %2555 = vmatmul.f32.gmra.mxu0 %v1898
        %v2556 = vpop.f32.mrf.mxu0
        %2557 = vmatmul.f32.gmra.mxu0 %v1901
        %v2558 = vpop.f32.mrf.mxu0
        %v2559 = vadd.f32 0.0, %v2558
        %2560 = vmatmul.f32.gmra.mxu0 %v1904
        %v2561 = vpop.f32.mrf.mxu0
        %v2562 = vadd.f32 0.0, %v2561
        %2563 = vmatmul.f32.gmra.mxu0 %v1907
        %v2564 = vpop.f32.mrf.mxu0
        %v2565 = vadd.f32 0.0, %v2564
        %2566 = vmatmul.f32.gmra.mxu0 %v1910
        %v2567 = vpop.f32.mrf.mxu0
        %2568 = vmatmul.f32.gmra.mxu0 %v1913
        %v2569 = vpop.f32.mrf.mxu0
        %v2570 = vadd.f32 0.0, %v2569
        %2571 = vmatmul.f32.gmra.mxu0 %v1916
        %v2572 = vpop.f32.mrf.mxu0
        %v2573 = vadd.f32 0.0, %v2572
        %2574 = vmatmul.f32.gmra.mxu0 %v1919
        %v2575 = vpop.f32.mrf.mxu0
        %v2576 = vadd.f32 0.0, %v2575
        %2577 = vmatmul.f32.gmra.mxu0 %v1922
        %v2578 = vpop.f32.mrf.mxu0
        %2579 = vdwg.mxu0
        %v2580 = vadd.f32 %v1491, %v2405
        %v2581 = vadd.f32 %v1494, %v2408
        %v2582 = vadd.f32 %v1497, %v2411
        %v2583 = vadd.f32 %v1502, %v2416
        %v2584 = vadd.f32 %v1505, %v2419
        %v2585 = vadd.f32 %v1508, %v2422
        %v2586 = vadd.f32 %v1513, %v2427
        %v2587 = vadd.f32 %v1516, %v2430
        %v2588 = vadd.f32 %v1519, %v2433
        %v2589 = vadd.f32 %v1524, %v2438
        %v2590 = vadd.f32 %v1527, %v2441
        %v2591 = vadd.f32 %v1530, %v2444
        %v2592 = vadd.f32 %v1535, %v2449
        %v2593 = vadd.f32 %v1538, %v2452
        %v2594 = vadd.f32 %v1541, %v2455
        %v2595 = vadd.f32 %v1546, %v2460
        %v2596 = vadd.f32 %v1549, %v2463
        %v2597 = vadd.f32 %v1552, %v2466
        %v2598 = vadd.f32 %v1557, %v2471
        %v2599 = vadd.f32 %v1560, %v2474
        %v2600 = vadd.f32 %v1563, %v2477
        %v2601 = vadd.f32 %v1568, %v2482
        %v2602 = vadd.f32 %v1571, %v2485
        %v2603 = vadd.f32 %v1574, %v2488
        %v2604 = vadd.f32 %v1579, %v2493
        %v2605 = vadd.f32 %v1582, %v2496
        %v2606 = vadd.f32 %v1585, %v2499
        %v2607 = vadd.f32 %v1590, %v2504
        %v2608 = vadd.f32 %v1593, %v2507
        %v2609 = vadd.f32 %v1596, %v2510
        %v2610 = vadd.f32 %v1601, %v2515
        %v2611 = vadd.f32 %v1604, %v2518
        %v2612 = vadd.f32 %v1607, %v2521
        %v2613 = vadd.f32 %v1612, %v2526
        %v2614 = vadd.f32 %v1615, %v2529
        %v2615 = vadd.f32 %v1618, %v2532
        %v2616 = vadd.f32 %v1623, %v2537
        %v2617 = vadd.f32 %v1626, %v2540
        %v2618 = vadd.f32 %v1629, %v2543
        %v2619 = vadd.f32 %v1634, %v2548
        %v2620 = vadd.f32 %v1637, %v2551
        %v2621 = vadd.f32 %v1640, %v2554
        %v2622 = vadd.f32 %v1645, %v2559
        %v2623 = vadd.f32 %v1648, %v2562
        %v2624 = vadd.f32 %v1651, %v2565
        %v2625 = vadd.f32 %v1656, %v2570
        %v2626 = vadd.f32 %v1659, %v2573
        %v2627 = vadd.f32 %v1662, %v2576
        %vm2676 = vcmask 1046528
        %v2677 = vrot.slane %v2334, 1
        %v2678 = vrot.slane %v2335, 1
        %v2679 = vsel %vm2676, %v2677, %v2678
        %v2680 = vrot.slane %v2336, 1
        %v2681 = vsel %vm2676, %v2678, %v2680
        %v2682 = vrot.slane %v2337, 1
        %v2683 = vrot.slane %v2338, 1
        %v2684 = vsel %vm2676, %v2682, %v2683
        %v2685 = vrot.slane %v2339, 1
        %v2686 = vsel %vm2676, %v2683, %v2685
        %v2687 = vrot.slane %v2340, 1
        %v2688 = vrot.slane %v2341, 1
        %v2689 = vsel %vm2676, %v2687, %v2688
        %v2690 = vrot.slane %v2342, 1
        %v2691 = vsel %vm2676, %v2688, %v2690
        %v2692 = vrot.slane %v2343, 1
        %v2693 = vrot.slane %v2344, 1
        %v2694 = vsel %vm2676, %v2692, %v2693
        %v2695 = vrot.slane %v2345, 1
        %v2696 = vsel %vm2676, %v2693, %v2695
        %v2697 = vrot.slane %v2346, 1
        %v2698 = vrot.slane %v2347, 1
        %v2699 = vsel %vm2676, %v2697, %v2698
        %v2700 = vrot.slane %v2348, 1
        %v2701 = vsel %vm2676, %v2698, %v2700
        %v2702 = vrot.slane %v2349, 1
        %v2703 = vrot.slane %v2350, 1
        %v2704 = vsel %vm2676, %v2702, %v2703
        %v2705 = vrot.slane %v2351, 1
        %v2706 = vsel %vm2676, %v2703, %v2705
        %v2707 = vrot.slane %v2352, 1
        %v2708 = vrot.slane %v2353, 1
        %v2709 = vsel %vm2676, %v2707, %v2708
        %v2710 = vrot.slane %v2354, 1
        %v2711 = vsel %vm2676, %v2708, %v2710
        %v2712 = vrot.slane %v2355, 1
        %v2713 = vrot.slane %v2356, 1
        %v2714 = vsel %vm2676, %v2712, %v2713
        %v2715 = vrot.slane %v2357, 1
        %v2716 = vsel %vm2676, %v2713, %v2715
        %v2717 = vrot.slane %v2358, 1
        %v2718 = vrot.slane %v2359, 1
        %v2719 = vsel %vm2676, %v2717, %v2718
        %v2720 = vrot.slane %v2360, 1
        %v2721 = vsel %vm2676, %v2718, %v2720
        %v2722 = vrot.slane %v2361, 1
        %v2723 = vrot.slane %v2362, 1
        %v2724 = vsel %vm2676, %v2722, %v2723
        %v2725 = vrot.slane %v2363, 1
        %v2726 = vsel %vm2676, %v2723, %v2725
        %v2727 = vrot.slane %v2364, 1
        %v2728 = vrot.slane %v2365, 1
        %v2729 = vsel %vm2676, %v2727, %v2728
        %v2730 = vrot.slane %v2366, 1
        %v2731 = vsel %vm2676, %v2728, %v2730
        %v2732 = vrot.slane %v2367, 1
        %v2733 = vrot.slane %v2368, 1
        %v2734 = vsel %vm2676, %v2732, %v2733
        %v2735 = vrot.slane %v2369, 1
        %v2736 = vsel %vm2676, %v2733, %v2735
        %v2737 = vrot.slane %v2370, 1
        %v2738 = vrot.slane %v2371, 1
        %v2739 = vsel %vm2676, %v2737, %v2738
        %v2740 = vrot.slane %v2372, 1
        %v2741 = vsel %vm2676, %v2738, %v2740
        %v2742 = vrot.slane %v2373, 1
        %v2743 = vrot.slane %v2374, 1
        %v2744 = vsel %vm2676, %v2742, %v2743
        %v2745 = vrot.slane %v2375, 1
        %v2746 = vsel %vm2676, %v2743, %v2745
        %v2747 = vrot.slane %v2376, 1
        %v2748 = vrot.slane %v2377, 1
        %v2749 = vsel %vm2676, %v2747, %v2748
        %v2750 = vrot.slane %v2378, 1
        %v2751 = vsel %vm2676, %v2748, %v2750
        %v2752 = vrot.slane %v2379, 1
        %v2753 = vrot.slane %v2380, 1
        %v2754 = vsel %vm2676, %v2752, %v2753
        %v2755 = vrot.slane %v2381, 1
        %v2756 = vsel %vm2676, %v2753, %v2755
        %v2789 = vadd.f32 %v2104, %v2679
        %v2790 = vadd.f32 %v2105, %v2681
        %v2791 = vadd.f32 %v2106, %v2684
        %v2792 = vadd.f32 %v2107, %v2686
        %v2793 = vadd.f32 %v2108, %v2689
        %v2794 = vadd.f32 %v2109, %v2691
        %v2795 = vadd.f32 %v2110, %v2694
        %v2796 = vadd.f32 %v2111, %v2696
        %v2797 = vadd.f32 %v2112, %v2699
        %v2798 = vadd.f32 %v2113, %v2701
        %v2799 = vadd.f32 %v2114, %v2704
        %v2800 = vadd.f32 %v2115, %v2706
        %v2801 = vadd.f32 %v2116, %v2709
        %v2802 = vadd.f32 %v2117, %v2711
        %v2803 = vadd.f32 %v2118, %v2714
        %v2804 = vadd.f32 %v2119, %v2716
        %v2805 = vadd.f32 %v2120, %v2719
        %v2806 = vadd.f32 %v2121, %v2721
        %v2807 = vadd.f32 %v2122, %v2724
        %v2808 = vadd.f32 %v2123, %v2726
        %v2809 = vadd.f32 %v2124, %v2729
        %v2810 = vadd.f32 %v2125, %v2731
        %v2811 = vadd.f32 %v2126, %v2734
        %v2812 = vadd.f32 %v2127, %v2736
        %v2813 = vadd.f32 %v2128, %v2739
        %v2814 = vadd.f32 %v2129, %v2741
        %v2815 = vadd.f32 %v2130, %v2744
        %v2816 = vadd.f32 %v2131, %v2746
        %v2817 = vadd.f32 %v2132, %v2749
        %v2818 = vadd.f32 %v2133, %v2751
        %v2819 = vadd.f32 %v2134, %v2754
        %v2820 = vadd.f32 %v2135, %v2756
        %vm2869 = vcmask 1045504
        %v2870 = vrot.slane %v2580, 2
        %v2871 = vrot.slane %v2581, 2
        %v2872 = vsel %vm2869, %v2870, %v2871
        %v2873 = vrot.slane %v2582, 2
        %v2874 = vsel %vm2869, %v2871, %v2873
        %v2875 = vrot.slane %v2583, 2
        %v2876 = vrot.slane %v2584, 2
        %v2877 = vsel %vm2869, %v2875, %v2876
        %v2878 = vrot.slane %v2585, 2
        %v2879 = vsel %vm2869, %v2876, %v2878
        %v2880 = vrot.slane %v2586, 2
        %v2881 = vrot.slane %v2587, 2
        %v2882 = vsel %vm2869, %v2880, %v2881
        %v2883 = vrot.slane %v2588, 2
        %v2884 = vsel %vm2869, %v2881, %v2883
        %v2885 = vrot.slane %v2589, 2
        %v2886 = vrot.slane %v2590, 2
        %v2887 = vsel %vm2869, %v2885, %v2886
        %v2888 = vrot.slane %v2591, 2
        %v2889 = vsel %vm2869, %v2886, %v2888
        %v2890 = vrot.slane %v2592, 2
        %v2891 = vrot.slane %v2593, 2
        %v2892 = vsel %vm2869, %v2890, %v2891
        %v2893 = vrot.slane %v2594, 2
        %v2894 = vsel %vm2869, %v2891, %v2893
        %v2895 = vrot.slane %v2595, 2
        %v2896 = vrot.slane %v2596, 2
        %v2897 = vsel %vm2869, %v2895, %v2896
        %v2898 = vrot.slane %v2597, 2
        %v2899 = vsel %vm2869, %v2896, %v2898
        %v2900 = vrot.slane %v2598, 2
        %v2901 = vrot.slane %v2599, 2
        %v2902 = vsel %vm2869, %v2900, %v2901
        %v2903 = vrot.slane %v2600, 2
        %v2904 = vsel %vm2869, %v2901, %v2903
        %v2905 = vrot.slane %v2601, 2
        %v2906 = vrot.slane %v2602, 2
        %v2907 = vsel %vm2869, %v2905, %v2906
        %v2908 = vrot.slane %v2603, 2
        %v2909 = vsel %vm2869, %v2906, %v2908
        %v2910 = vrot.slane %v2604, 2
        %v2911 = vrot.slane %v2605, 2
        %v2912 = vsel %vm2869, %v2910, %v2911
        %v2913 = vrot.slane %v2606, 2
        %v2914 = vsel %vm2869, %v2911, %v2913
        %v2915 = vrot.slane %v2607, 2
        %v2916 = vrot.slane %v2608, 2
        %v2917 = vsel %vm2869, %v2915, %v2916
        %v2918 = vrot.slane %v2609, 2
        %v2919 = vsel %vm2869, %v2916, %v2918
        %v2920 = vrot.slane %v2610, 2
        %v2921 = vrot.slane %v2611, 2
        %v2922 = vsel %vm2869, %v2920, %v2921
        %v2923 = vrot.slane %v2612, 2
        %v2924 = vsel %vm2869, %v2921, %v2923
        %v2925 = vrot.slane %v2613, 2
        %v2926 = vrot.slane %v2614, 2
        %v2927 = vsel %vm2869, %v2925, %v2926
        %v2928 = vrot.slane %v2615, 2
        %v2929 = vsel %vm2869, %v2926, %v2928
        %v2930 = vrot.slane %v2616, 2
        %v2931 = vrot.slane %v2617, 2
        %v2932 = vsel %vm2869, %v2930, %v2931
        %v2933 = vrot.slane %v2618, 2
        %v2934 = vsel %vm2869, %v2931, %v2933
        %v2935 = vrot.slane %v2619, 2
        %v2936 = vrot.slane %v2620, 2
        %v2937 = vsel %vm2869, %v2935, %v2936
        %v2938 = vrot.slane %v2621, 2
        %v2939 = vsel %vm2869, %v2936, %v2938
        %v2940 = vrot.slane %v2622, 2
        %v2941 = vrot.slane %v2623, 2
        %v2942 = vsel %vm2869, %v2940, %v2941
        %v2943 = vrot.slane %v2624, 2
        %v2944 = vsel %vm2869, %v2941, %v2943
        %v2945 = vrot.slane %v2625, 2
        %v2946 = vrot.slane %v2626, 2
        %v2947 = vsel %vm2869, %v2945, %v2946
        %v2948 = vrot.slane %v2627, 2
        %v2949 = vsel %vm2869, %v2946, %v2948
        %v2982 = vadd.f32 %v2789, %v2872
        %v2983 = vadd.f32 %v2790, %v2874
        %v2984 = vadd.f32 %v2791, %v2877
        %v2985 = vadd.f32 %v2792, %v2879
        %v2986 = vadd.f32 %v2793, %v2882
        %v2987 = vadd.f32 %v2794, %v2884
        %v2988 = vadd.f32 %v2795, %v2887
        %v2989 = vadd.f32 %v2796, %v2889
        %v2990 = vadd.f32 %v2797, %v2892
        %v2991 = vadd.f32 %v2798, %v2894
        %v2992 = vadd.f32 %v2799, %v2897
        %v2993 = vadd.f32 %v2800, %v2899
        %v2994 = vadd.f32 %v2801, %v2902
        %v2995 = vadd.f32 %v2802, %v2904
        %v2996 = vadd.f32 %v2803, %v2907
        %v2997 = vadd.f32 %v2804, %v2909
        %v2998 = vadd.f32 %v2805, %v2912
        %v2999 = vadd.f32 %v2806, %v2914
        %v3000 = vadd.f32 %v2807, %v2917
        %v3001 = vadd.f32 %v2808, %v2919
        %v3002 = vadd.f32 %v2809, %v2922
        %v3003 = vadd.f32 %v2810, %v2924
        %v3004 = vadd.f32 %v2811, %v2927
        %v3005 = vadd.f32 %v2812, %v2929
        %v3006 = vadd.f32 %v2813, %v2932
        %v3007 = vadd.f32 %v2814, %v2934
        %v3008 = vadd.f32 %v2815, %v2937
        %v3009 = vadd.f32 %v2816, %v2939
        %v3010 = vadd.f32 %v2817, %v2942
        %v3011 = vadd.f32 %v2818, %v2944
        %v3012 = vadd.f32 %v2819, %v2947
        %v3013 = vadd.f32 %v2820, %v2949
        %v3014 = vld [vmem:[%s236] sm:$0x1]
        %v3016 = vperm.slane %v3014, 0
        %v3018 = vadd.f32 %v2982, %v3016
        %v3019 = vadd.f32 %v2983, %v3016
        %v3020 = vadd.f32 %v2984, %v3016
        %v3021 = vadd.f32 %v2985, %v3016
        %v3022 = vadd.f32 %v2986, %v3016
        %v3023 = vadd.f32 %v2987, %v3016
        %v3024 = vadd.f32 %v2988, %v3016
        %v3025 = vadd.f32 %v2989, %v3016
        %v3026 = vadd.f32 %v2990, %v3016
        %v3027 = vadd.f32 %v2991, %v3016
        %v3028 = vadd.f32 %v2992, %v3016
        %v3029 = vadd.f32 %v2993, %v3016
        %v3030 = vadd.f32 %v2994, %v3016
        %v3031 = vadd.f32 %v2995, %v3016
        %v3032 = vadd.f32 %v2996, %v3016
        %v3033 = vadd.f32 %v2997, %v3016
        %v3034 = vadd.f32 %v2998, %v3016
        %v3035 = vadd.f32 %v2999, %v3016
        %v3036 = vadd.f32 %v3000, %v3016
        %v3037 = vadd.f32 %v3001, %v3016
        %v3038 = vadd.f32 %v3002, %v3016
        %v3039 = vadd.f32 %v3003, %v3016
        %v3040 = vadd.f32 %v3004, %v3016
        %v3041 = vadd.f32 %v3005, %v3016
        %v3042 = vadd.f32 %v3006, %v3016
        %v3043 = vadd.f32 %v3007, %v3016
        %v3044 = vadd.f32 %v3008, %v3016
        %v3045 = vadd.f32 %v3009, %v3016
        %v3046 = vadd.f32 %v3010, %v3016
        %v3047 = vadd.f32 %v3011, %v3016
        %v3048 = vadd.f32 %v3012, %v3016
        %v3049 = vadd.f32 %v3013, %v3016
        %v3050 = vmax.f32 %v3018, 0.0
        %v3051 = vmax.f32 %v3019, 0.0
        %v3052 = vmax.f32 %v3020, 0.0
        %v3053 = vmax.f32 %v3021, 0.0
        %v3054 = vmax.f32 %v3022, 0.0
        %v3055 = vmax.f32 %v3023, 0.0
        %v3056 = vmax.f32 %v3024, 0.0
        %v3057 = vmax.f32 %v3025, 0.0
        %v3058 = vmax.f32 %v3026, 0.0
        %v3059 = vmax.f32 %v3027, 0.0
        %v3060 = vmax.f32 %v3028, 0.0
        %v3061 = vmax.f32 %v3029, 0.0
        %v3062 = vmax.f32 %v3030, 0.0
        %v3063 = vmax.f32 %v3031, 0.0
        %v3064 = vmax.f32 %v3032, 0.0
        %v3065 = vmax.f32 %v3033, 0.0
        %v3066 = vmax.f32 %v3034, 0.0
        %v3067 = vmax.f32 %v3035, 0.0
        %v3068 = vmax.f32 %v3036, 0.0
        %v3069 = vmax.f32 %v3037, 0.0
        %v3070 = vmax.f32 %v3038, 0.0
        %v3071 = vmax.f32 %v3039, 0.0
        %v3072 = vmax.f32 %v3040, 0.0
        %v3073 = vmax.f32 %v3041, 0.0
        %v3074 = vmax.f32 %v3042, 0.0
        %v3075 = vmax.f32 %v3043, 0.0
        %v3076 = vmax.f32 %v3044, 0.0
        %v3077 = vmax.f32 %v3045, 0.0
        %v3078 = vmax.f32 %v3046, 0.0
        %v3079 = vmax.f32 %v3047, 0.0
        %v3080 = vmax.f32 %v3048, 0.0
        %v3081 = vmax.f32 %v3049, 0.0
        %3082 = vst [vmem:[%s220] sm:$0xff] %v3050
        %3083 = vst [vmem:[%s220 + $0x8] sm:$0xff] %v3051
        %3084 = vst [vmem:[%s220 + $0x10] sm:$0xff] %v3052
        %3085 = vst [vmem:[%s220 + $0x18] sm:$0xff] %v3053
        %3086 = vst [vmem:[%s220 + $0x20] sm:$0xff] %v3054
        %3087 = vst [vmem:[%s220 + $0x28] sm:$0xff] %v3055
        %3088 = vst [vmem:[%s220 + $0x30] sm:$0xff] %v3056
        %3089 = vst [vmem:[%s220 + $0x38] sm:$0xff] %v3057
        %3090 = vst [vmem:[%s220 + $0x40] sm:$0xff] %v3058
        %3091 = vst [vmem:[%s220 + $0x48] sm:$0xff] %v3059
        %3092 = vst [vmem:[%s220 + $0x50] sm:$0xff] %v3060
        %3093 = vst [vmem:[%s220 + $0x58] sm:$0xff] %v3061
        %3094 = vst [vmem:[%s220 + $0x60] sm:$0xff] %v3062
        %3095 = vst [vmem:[%s220 + $0x68] sm:$0xff] %v3063
        %3096 = vst [vmem:[%s220 + $0x70] sm:$0xff] %v3064
        %3097 = vst [vmem:[%s220 + $0x78] sm:$0xff] %v3065
        %3098 = vst [vmem:[%s220 + $0x80] sm:$0xff] %v3066
        %3099 = vst [vmem:[%s220 + $0x88] sm:$0xff] %v3067
        %3100 = vst [vmem:[%s220 + $0x90] sm:$0xff] %v3068
        %3101 = vst [vmem:[%s220 + $0x98] sm:$0xff] %v3069
        %3102 = vst [vmem:[%s220 + $0xa0] sm:$0xff] %v3070
        %3103 = vst [vmem:[%s220 + $0xa8] sm:$0xff] %v3071
        %3104 = vst [vmem:[%s220 + $0xb0] sm:$0xff] %v3072
        %3105 = vst [vmem:[%s220 + $0xb8] sm:$0xff] %v3073
        %3106 = vst [vmem:[%s220 + $0xc0] sm:$0xff] %v3074
        %3107 = vst [vmem:[%s220 + $0xc8] sm:$0xff] %v3075
        %3108 = vst [vmem:[%s220 + $0xd0] sm:$0xff] %v3076
        %3109 = vst [vmem:[%s220 + $0xd8] sm:$0xff] %v3077
        %3110 = vst [vmem:[%s220 + $0xe0] sm:$0xff] %v3078
        %3111 = vst [vmem:[%s220 + $0xe8] sm:$0xff] %v3079
        %3112 = vst [vmem:[%s220 + $0xf0] sm:$0xff] %v3080
        %3113 = vst [vmem:[%s220 + $0xf8] sm:$0xff] %v3081
        %s3114 = sand.u32 %s128, 1
        %s3115 = scalar_lea.sflag [#allocation3], %s3114
        %s3116 = sand.u32 %s128, 1
        %s3117 = smul.addr %s3116, 256
        %s3118 = scalar_lea.vmem [#allocation2], %s3117
        // Predicated region
        $region33: #{tpu_custom_call.1} parent=31 // pred_check
          %p3119 = pneg %p138
        $region34: #{tpu_custom_call.1} parent=31 // pred_check_branch
          %3121 = sbr.rel (%p3119) target = $region36
        $region35: #{tpu_custom_call.1} parent=31 // pred_region
          %3123 = vsyncadd %s3115, 0
          %s3124 = smul.addr %s23, 32
          %s3125 = sadd.s32 %s24, %s3124
          %s3126 = smul.addr %s22, 32
          %s3127 = sadd.s32 %s3125, %s3126
          %s3128 = smul.addr %s3127, 8
          %s3129 = scalar_lea.hbm %s3, %s3128
          %s3130 = sshll.u32 %s3118, 4
          %s3131 = int_to_ptr.vmem [resolvable:$true] %s3130
          %s3132 = sshll.u32 %s3129, 4
          %s3133 = int_to_ptr.hbm [resolvable:$true] %s3132
          %3138 = dma.vmem_to_hbm [thread:$0]  %s3131, 4096, %s3133, %s3115, 128, 128, 8
        $region36: #{tpu_custom_call.1} parent=31 // pred_fallthru
          _
      $region32: #{tpu_custom_call.1} parent=5 // pred_fallthru
        _
      %p3139 = scmp.le.s32.totalorder 2, %s12
      // Predicated region
      $region37: #{tpu_custom_call.1} parent=5 // pred_check
        %p3140 = pneg %p3139
      $region38: #{tpu_custom_call.1} parent=5 // pred_check_branch
        %3142 = sbr.rel (%p3140) target = $region40
      $region39: #{tpu_custom_call.1} parent=5 // pred_region
        %s3143 = ssub.s32 %s12, 2
        // Predicated region
        $region41: #{tpu_custom_call.1} parent=39 // pred_check
          %p3144 = pneg %p144
        $region42: #{tpu_custom_call.1} parent=39 // pred_check_branch
          %3146 = sbr.rel (%p3144) target = $region44
        $region43: #{tpu_custom_call.1} parent=39 // pred_region
          %s3147 = sand.u32 %s129, 1
          %s3148 = scalar_lea.sflag [#allocation3], %s3147
          %s3149 = sand.u32 %s129, 1
          %s3150 = smul.addr %s3149, 256
          %s3151 = scalar_lea.vmem [#allocation2], %s3150
          %3153 = dma.done %s3148, 4096
        $region44: #{tpu_custom_call.1} parent=39 // pred_fallthru
          _
      $region40: #{tpu_custom_call.1} parent=5 // pred_fallthru
        _
    $region6: #{tpu_custom_call.1} parent=1 // loop_footer
      %s16 = sadd.s32 1, %s12
    $region7: #{tpu_custom_call.1} parent=1 // loop_footer_branch
      %11 = sbr.rel target = $region3
    $region8: #{tpu_custom_call.1} parent=1 // loop_exit
      _
    %3154 = vsyncpa [#allocation3], 1
    %s3155 = scalar_lea.sflag [#allocation3], 1
    %3156 = vsyncpa %s3155, 1

</llo_original>
